<compile_context>
chip_gen: v6e
topology: v6e:2x2x1
jax: 0.10.0
libtpu: 0.0.40
codegen_flags: <defaults>
</compile_context>

<pallas_src>
import functools

import jax
import jax.numpy as jnp
import numpy as np
from jax.experimental import pallas as pl
from jax.experimental.pallas import tpu as pltpu

_LANE = 128


def _rup(d, m=_LANE):
    return ((d + m - 1) // m) * m


def _pad2(arr, rows, cols, dtype):
    out = jnp.zeros((rows, cols), dtype)
    return out.at[: arr.shape[0], : arr.shape[1]].set(arr.astype(dtype))


# ----------------------------- Pallas kernel --------------------------------
def _node_model_a_kernel(
    x_ref, e_ref, u_ref, msrc_ref, mdst_ref, mb_ref,     # data + one-hot maps
    wkq_ref, w1x_ref, w1e_ref, w1u_ref, w2_ref, b_ref,   # consolidated params
    out_ref,
    kq_sc, eagg_sc,                                      # VMEM scratch
    *, HP, HIDP,
):
    i = pl.program_id(0)

    # --- once: per-node k|q features and zeroed e_agg accumulator -----------
    @pl.when(i == 0)
    def _init():
        kq_sc[...] = (
            jnp.dot(x_ref[...], wkq_ref[...], preferred_element_type=jnp.float32)
            + b_ref[:, : 2 * HP]                                   # bk | bq
        )
        eagg_sc[...] = jnp.zeros_like(eagg_sc)

    # --- per edge-tile: attention + scatter-add into nodes ------------------
    m_src = msrc_ref[...]                                          # [te, N] one-hot (bf16)
    m_dst = mdst_ref[...]                                          # [te, N]
    k_e = jnp.dot(m_src, kq_sc[:, :HP], preferred_element_type=jnp.float32)   # [te, HP]
    q_e = jnp.dot(m_dst, kq_sc[:, HP:], preferred_element_type=jnp.float32)   # [te, HP]
    # cross-lane reduce goes to the XLU slot; sigmoid goes to the EUP slot.
    a = jax.nn.sigmoid(jnp.sum(k_e * q_e, axis=-1, keepdims=True))            # [te, 1] f32
    ae = a * e_ref[...].astype(jnp.float32)                                   # [te, FE]
    # scatter_add(a*e, dest): contract the edge axis of the dest one-hot directly.
    eagg_sc[...] += jax.lax.dot_general(
        m_dst.astype(jnp.float32), ae,
        (((0,), (0,)), ((), ())),
        preferred_element_type=jnp.float32,
    )                                                                          # [N, FE]

    # --- last tile: phi_x MLP on concat([x, e_agg, u[batch]]) ---------------
    @pl.when(i == pl.num_programs(0) - 1)
    def _finalize():
        u_g = jnp.dot(mb_ref[...], u_ref[...], preferred_element_type=jnp.float32)  # [N, FU]
        # concat expressed as split matmuls summed (avoids an in-kernel relayout)
        h1 = (
            jnp.dot(x_ref[...], w1x_ref[...], preferred_element_type=jnp.float32)
            + jnp.dot(eagg_sc[...], w1e_ref[...], preferred_element_type=jnp.float32)
            + jnp.dot(u_g, w1u_ref[...], preferred_element_type=jnp.float32)
            + b_ref[:, 2 * HP : 2 * HP + HIDP]                      # b1
        )
        h1 = jnp.maximum(h1, 0.0)
        out_ref[...] = (
            jnp.dot(h1, w2_ref[...], preferred_element_type=jnp.float32)
            + b_ref[:, 2 * HP + HIDP :]                             # b2
        ).astype(out_ref.dtype)


# ------------------------------- wrapper -------------------------------------
def node_model_a(x, edge_index, e, u, batch, params, *, edge_tile=512,
                 compute_dtype=jnp.bfloat16):
    """NodeModel_A forward as one Pallas call. Wrapper does layout plumbing only."""
    E = e.shape[0]
    if E == 0:
        return None                       # matches PyTorch `if not len(e): return`

    N, f_x = x.shape
    _, f_e = e.shape
    B, f_u = u.shape
    h = params["wk"].shape[1]
    hid = params["w1"].shape[1]
    f_x_out = params["w2"].shape[1]

    # lane-friendly padded dims (all multiples of 128)
    FXP, FEP, FUP = _rup(f_x), _rup(f_e), _rup(f_u)
    HP, HIDP, FOP = _rup(h), _rup(hid), _rup(f_x_out)

    edge_tile = max(8, min(edge_tile, _rup(E, 8)))
    E_pad = _rup(E, edge_tile)
    n_tiles = E_pad // edge_tile

    cdt = compute_dtype
    src = edge_index[0].astype(jnp.int32)
    dst = edge_index[1].astype(jnp.int32)
    pad_idx = jnp.full((E_pad,), -1, jnp.int32)      # -1 -> all-zero one-hot row
    src_p = pad_idx.at[:E].set(src)
    dst_p = pad_idx.at[:E].set(dst)

    x_p = _pad2(x, N, FXP, cdt)
    e_p = _pad2(e, E_pad, FEP, cdt)                  # padded edges are zero rows
    u_p = _pad2(u, B, FUP, cdt)
    m_src = jax.nn.one_hot(src_p, N, dtype=cdt)      # [E_pad, N]
    m_dst = jax.nn.one_hot(dst_p, N, dtype=cdt)      # [E_pad, N]
    m_batch = jax.nn.one_hot(batch, B, dtype=cdt)    # [N, B]

    # phi_k / phi_q fused into a single [f_x, 2h] weight (both consume x)
    wkq = jnp.zeros((FXP, 2 * HP), cdt)
    wkq = wkq.at[:f_x, :h].set(params["wk"].astype(cdt))
    wkq = wkq.at[:f_x, HP:HP + h].set(params["wq"].astype(cdt))

    w1 = params["w1"]
    w1x = _pad2(w1[:f_x], FXP, HIDP, cdt)
    w1e = _pad2(w1[f_x:f_x + f_e], FEP, HIDP, cdt)
    w1u = _pad2(w1[f_x + f_e:], FUP, HIDP, cdt)
    w2 = _pad2(params["w2"], HIDP, FOP, cdt)

    # all biases packed into one lane-aligned f32 vector: [bk | bq | b1 | b2]
    b_all = jnp.zeros((1, 2 * HP + HIDP + FOP), jnp.float32)
    b_all = b_all.at[:, :h].set(params["bk"])
    b_all = b_all.at[:, HP:HP + h].set(params["bq"])
    b_all = b_all.at[:, 2 * HP:2 * HP + hid].set(params["b1"])
    b_all = b_all.at[:, 2 * HP + HIDP:2 * HP + HIDP + f_x_out].set(params["b2"])

    args = (x_p, e_p, u_p, m_src, m_dst, m_batch, wkq, w1x, w1e, w1u, w2, b_all)

    full = lambda shape: pl.BlockSpec(shape, lambda i: (0, 0))
    tiled = lambda shape: pl.BlockSpec(shape, lambda i: (i, 0))
    in_specs = [
        full((N, FXP)),                 # x (resident across the whole grid)
        tiled((edge_tile, FEP)),        # e, tiled over edges
        full((B, FUP)),                 # u
        tiled((edge_tile, N)),          # one-hot src
        tiled((edge_tile, N)),          # one-hot dest
        full((N, B)),                   # one-hot batch
        full((FXP, 2 * HP)),            # wkq
        full((FXP, HIDP)),              # w1x
        full((FEP, HIDP)),              # w1e
        full((FUP, HIDP)),              # w1u
        full((HIDP, FOP)),              # w2
        full((1, 2 * HP + HIDP + FOP)), # packed biases
    ]

    flops = 2 * (N * FXP * 2 * HP
                 + E_pad * N * (2 * HP + FEP)
                 + N * B * FUP
                 + N * (FXP + FEP + FUP) * HIDP
                 + N * HIDP * FOP)
    bytes_accessed = int(sum(int(a.nbytes) for a in args) + N * FOP * 4)
    cost = pl.CostEstimate(flops=int(flops), transcendentals=int(E_pad),
                           bytes_accessed=bytes_accessed)

    kernel = functools.partial(_node_model_a_kernel, HP=HP, HIDP=HIDP)

    out_padded = pl.pallas_call(
        kernel,
        out_shape=jax.ShapeDtypeStruct((N, FOP), jnp.float32),
        grid_spec=pltpu.PrefetchScalarGridSpec(
            num_scalar_prefetch=0,
            grid=(n_tiles,),
            in_specs=in_specs,
            out_specs=pl.BlockSpec((N, FOP), lambda i: (0, 0)),
            scratch_shapes=[
                pltpu.VMEM((N, 2 * HP), jnp.float32),   # per-node k|q
                pltpu.VMEM((N, FEP), jnp.float32),      # e_agg accumulator
            ],
        ),
        compiler_params=pltpu.CompilerParams(
            dimension_semantics=("arbitrary",),          # edge axis is a reduction
            vmem_limit_bytes=64 * 1024 * 1024,
        ),
        cost_estimate=cost,
    )(*args)

    return out_padded[:, :f_x_out]


# --------------------------- reference (plain JAX, f32) -----------------------
def node_model_a_ref(x, edge_index, e, u, batch, params):
    src, dest = edge_index[0], edge_index[1]
    k = (x @ params["wk"] + params["bk"])[src]
    q = (x @ params["wq"] + params["bq"])[dest]
    a = jax.nn.sigmoid(jnp.sum(k * q, axis=-1, keepdims=True))
    N = x.shape[0]
    e_agg = jnp.zeros((N, e.shape[1]), x.dtype).at[dest].add(a * e)
    cat = jnp.concatenate([x, e_agg, u[batch]], axis=1)
    h1 = jax.nn.relu(cat @ params["w1"] + params["b1"])
    return h1 @ params["w2"] + params["b2"]


# --------------------------------- main --------------------------------------
if __name__ == "__main__":
    N, E, B = 16, 24, 2          # nodes, edges, graphs
    f_x, f_e, f_u = 8, 4, 4      # node / edge / global feature dims
    h = 16                       # attention dim
    hid = 32                     # phi_x hidden width (model_fn choice)
    f_x_out = f_x                # default in __init__

    key = jax.random.PRNGKey(0)
    ks = jax.random.split(key, 14)

    x = jax.random.normal(ks[0], (N, f_x), jnp.float32)
    e = jax.random.normal(ks[1], (E, f_e), jnp.float32)
    u = jax.random.normal(ks[2], (B, f_u), jnp.float32)
    src = jax.random.randint(ks[3], (E,), 0, N, jnp.int32)
    dst = jax.random.randint(ks[4], (E,), 0, N, jnp.int32)
    edge_index = jnp.stack([src, dst])
    batch = jnp.concatenate(
        [jnp.zeros(N // 2, jnp.int32), jnp.ones(N - N // 2, jnp.int32)])

    def lin_init(kw, kb, fan_in, fan_out):
        # PyTorch-style uniform(-1/sqrt(fan_in), 1/sqrt(fan_in)); stored [in, out].
        bound = 1.0 / np.sqrt(fan_in)
        w = jax.random.uniform(kw, (fan_in, fan_out), jnp.float32, -bound, bound)
        b = jax.random.uniform(kb, (1, fan_out), jnp.float32, -bound, bound)
        return w, b

    wk, bk = lin_init(ks[5], ks[6], f_x, h)                     # phi_k
    wq, bq = lin_init(ks[7], ks[8], f_x, h)                     # phi_q
    w1, b1 = lin_init(ks[9], ks[10], f_e + f_x + f_u, hid)      # phi_x layer 1
    w2, b2 = lin_init(ks[11], ks[12], hid, f_x_out)             # phi_x layer 2
    params = {"wk": wk, "bk": bk, "wq": wq, "bq": bq,
              "w1": w1, "b1": b1, "w2": w2, "b2": b2}

    # edge_tile=8 -> multiple grid steps, exercising the accumulator path.
    out = node_model_a(x, edge_index, e, u, batch, params, edge_tile=8)
    out = jax.block_until_ready(out)

    ref = node_model_a_ref(x, edge_index, e, u, batch, params)
    # bf16 inputs/weights with f32 accumulation -> loosened tolerance.
    np.testing.assert_allclose(np.asarray(out), np.asarray(ref), rtol=3e-2, atol=3e-2)

    print("KERNEL_OK")
</pallas_src>

<mosaic_0001>
module attributes {stable_mosaic.version = 11 : i64} {
  func.func @_node_model_a_kernel(%arg0: i32, %arg1: memref<16x128xbf16, #tpu.memory_space<vmem>>, %arg2: memref<8x128xbf16, #tpu.memory_space<vmem>>, %arg3: memref<2x128xbf16, #tpu.memory_space<vmem>>, %arg4: memref<8x16xbf16, #tpu.memory_space<vmem>>, %arg5: memref<8x16xbf16, #tpu.memory_space<vmem>>, %arg6: memref<16x2xbf16, #tpu.memory_space<vmem>>, %arg7: memref<128x256xbf16, #tpu.memory_space<vmem>>, %arg8: memref<128x128xbf16, #tpu.memory_space<vmem>>, %arg9: memref<128x128xbf16, #tpu.memory_space<vmem>>, %arg10: memref<128x128xbf16, #tpu.memory_space<vmem>>, %arg11: memref<128x128xbf16, #tpu.memory_space<vmem>>, %arg12: memref<1x512xf32, #tpu.memory_space<vmem>>, %arg13: memref<16x128xf32, #tpu.memory_space<vmem>>, %arg14: memref<16x256xf32, #tpu.memory_space<vmem>>, %arg15: memref<16x128xf32, #tpu.memory_space<vmem>>) attributes {dimension_semantics = [#tpu.dimension_semantics<arbitrary>], iteration_bounds = array<i64: 3>, scalar_prefetch = 0 : i64, scratch_operands = 2 : i64, tpu.core_type = #tpu.core_type<tc>, window_params = [{pipeline_mode = #tpu.pipeline_mode<synchronous>, transform_indices = @transform_0, window_bounds = array<i64: 16, 128>}, {transform_indices = @transform_1, window_bounds = array<i64: 8, 128>}, {pipeline_mode = #tpu.pipeline_mode<synchronous>, transform_indices = @transform_2, window_bounds = array<i64: 2, 128>}, {transform_indices = @transform_3, window_bounds = array<i64: 8, 16>}, {transform_indices = @transform_4, window_bounds = array<i64: 8, 16>}, {pipeline_mode = #tpu.pipeline_mode<synchronous>, transform_indices = @transform_5, window_bounds = array<i64: 16, 2>}, {pipeline_mode = #tpu.pipeline_mode<synchronous>, transform_indices = @transform_6, window_bounds = array<i64: 128, 256>}, {pipeline_mode = #tpu.pipeline_mode<synchronous>, transform_indices = @transform_7, window_bounds = array<i64: 128, 128>}, {pipeline_mode = #tpu.pipeline_mode<synchronous>, transform_indices = @transform_8, window_bounds = array<i64: 128, 128>}, {pipeline_mode = #tpu.pipeline_mode<synchronous>, transform_indices = @transform_9, window_bounds = array<i64: 128, 128>}, {pipeline_mode = #tpu.pipeline_mode<synchronous>, transform_indices = @transform_10, window_bounds = array<i64: 128, 128>}, {pipeline_mode = #tpu.pipeline_mode<synchronous>, transform_indices = @transform_11, window_bounds = array<i64: 1, 512>}, {pipeline_mode = #tpu.pipeline_mode<synchronous>, transform_indices = @transform_12, window_bounds = array<i64: 16, 128>}]} {
    %c0_i32 = arith.constant 0 : i32
    %0 = arith.cmpi eq, %arg0, %c0_i32 : i32
    %1 = arith.extui %0 : i1 to i32
    %c0_i32_0 = arith.constant 0 : i32
    %2 = arith.cmpi ne, %1, %c0_i32_0 : i32
    scf.if %2 {
      %c0_18 = arith.constant 0 : index
      %c0_19 = arith.constant 0 : index
      %29 = vector.load %arg1[%c0_18, %c0_19] : memref<16x128xbf16, #tpu.memory_space<vmem>>, vector<16x128xbf16>
      %c0_20 = arith.constant 0 : index
      %c0_21 = arith.constant 0 : index
      %30 = vector.load %arg7[%c0_20, %c0_21] : memref<128x256xbf16, #tpu.memory_space<vmem>>, vector<128x256xbf16>
      %cst_22 = arith.constant dense<0.000000e+00> : vector<16x256xf32>
      %31 = tpu.matmul %29, %30, %cst_22 {dimension_numbers = #tpu.dot_dimension_numbers<[1], [0], [0], [1], [0, 0, 1, 1], [], []>} : vector<16x128xbf16>, vector<128x256xbf16>, vector<16x256xf32> -> vector<16x256xf32>
      %c0_23 = arith.constant 0 : index
      %c0_24 = arith.constant 0 : index
      %32 = vector.load %arg12[%c0_23, %c0_24] : memref<1x512xf32, #tpu.memory_space<vmem>>, vector<1x256xf32>
      %33 = vector.broadcast %32 : vector<1x256xf32> to vector<16x256xf32>
      %34 = arith.addf %31, %33 : vector<16x256xf32>
      %c0_25 = arith.constant 0 : index
      %c0_26 = arith.constant 0 : index
      %35 = vector.load %arg14[%c0_25, %c0_26] : memref<16x256xf32, #tpu.memory_space<vmem>>, vector<16x256xf32>
      tpu.vector_store %arg14[%c0_25, %c0_26], %34 {strides = array<i32>} : memref<16x256xf32, #tpu.memory_space<vmem>>, vector<16x256xf32>,
      %cst_27 = arith.constant 0.000000e+00 : f32
      %36 = vector.broadcast %cst_27 : f32 to vector<16x128xf32>
      %c0_28 = arith.constant 0 : index
      %c0_29 = arith.constant 0 : index
      %37 = vector.load %arg15[%c0_28, %c0_29] : memref<16x128xf32, #tpu.memory_space<vmem>>, vector<16x128xf32>
      tpu.vector_store %arg15[%c0_28, %c0_29], %36 {strides = array<i32>} : memref<16x128xf32, #tpu.memory_space<vmem>>, vector<16x128xf32>,
    } else {
    }
    %c0 = arith.constant 0 : index
    %c0_1 = arith.constant 0 : index
    %3 = vector.load %arg4[%c0, %c0_1] : memref<8x16xbf16, #tpu.memory_space<vmem>>, vector<8x16xbf16>
    %c0_2 = arith.constant 0 : index
    %c0_3 = arith.constant 0 : index
    %4 = vector.load %arg5[%c0_2, %c0_3] : memref<8x16xbf16, #tpu.memory_space<vmem>>, vector<8x16xbf16>
    %c0_4 = arith.constant 0 : index
    %c0_5 = arith.constant 0 : index
    %5 = vector.load %arg14[%c0_4, %c0_5] : memref<16x256xf32, #tpu.memory_space<vmem>>, vector<16x128xf32>
    %cst = arith.constant dense<0.000000e+00> : vector<8x128xf32>
    %6 = tpu.matmul %3, %5, %cst {dimension_numbers = #tpu.dot_dimension_numbers<[1], [0], [0], [1], [0, 0, 1, 1], [], []>} : vector<8x16xbf16>, vector<16x128xf32>, vector<8x128xf32> -> vector<8x128xf32>
    %c0_6 = arith.constant 0 : index
    %c128 = arith.constant 128 : index
    %7 = vector.load %arg14[%c0_6, %c128] : memref<16x256xf32, #tpu.memory_space<vmem>>, vector<16x128xf32>
    %cst_7 = arith.constant dense<0.000000e+00> : vector<8x128xf32>
    %8 = tpu.matmul %4, %7, %cst_7 {dimension_numbers = #tpu.dot_dimension_numbers<[1], [0], [0], [1], [0, 0, 1, 1], [], []>} : vector<8x16xbf16>, vector<16x128xf32>, vector<8x128xf32> -> vector<8x128xf32>
    %9 = arith.mulf %6, %8 : vector<8x128xf32>
    %cst_8 = arith.constant dense<0.000000e+00> : vector<8xf32>
    %10 = vector.multi_reduction <add>, %9, %cst_8 [1] : vector<8x128xf32> to vector<8xf32>
    %11 = vector.shape_cast %10 : vector<8xf32> to vector<8x1xf32>
    %12 = arith.negf %11 : vector<8x1xf32>
    %13 = math.exp %12 : vector<8x1xf32>
    %cst_9 = arith.constant 1.000000e+00 : f32
    %14 = vector.broadcast %cst_9 : f32 to vector<8x1xf32>
    %15 = arith.addf %14, %13 : vector<8x1xf32>
    %16 = arith.divf %14, %15 : vector<8x1xf32>
    %c0_10 = arith.constant 0 : index
    %c0_11 = arith.constant 0 : index
    %17 = vector.load %arg2[%c0_10, %c0_11] : memref<8x128xbf16, #tpu.memory_space<vmem>>, vector<8x128xbf16>
    %18 = arith.extf %17 : vector<8x128xbf16> to vector<8x128xf32>
    %19 = vector.broadcast %16 : vector<8x1xf32> to vector<8x128xf32>
    %20 = arith.mulf %19, %18 : vector<8x128xf32>
    %c0_12 = arith.constant 0 : index
    %c0_13 = arith.constant 0 : index
    %21 = vector.load %arg15[%c0_12, %c0_13] : memref<16x128xf32, #tpu.memory_space<vmem>>, vector<16x128xf32>
    %22 = arith.extf %4 : vector<8x16xbf16> to vector<8x16xf32>
    %cst_14 = arith.constant dense<0.000000e+00> : vector<16x128xf32>
    %23 = tpu.matmul %22, %20, %cst_14 {dimension_numbers = #tpu.dot_dimension_numbers<[0], [0], [1], [1], [0, 1, 1, 1], [], []>} : vector<8x16xf32>, vector<8x128xf32>, vector<16x128xf32> -> vector<16x128xf32>
    %24 = arith.addf %21, %23 : vector<16x128xf32>
    %c0_15 = arith.constant 0 : index
    %c0_16 = arith.constant 0 : index
    %25 = vector.load %arg15[%c0_15, %c0_16] : memref<16x128xf32, #tpu.memory_space<vmem>>, vector<16x128xf32>
    tpu.vector_store %arg15[%c0_15, %c0_16], %24 {strides = array<i32>} : memref<16x128xf32, #tpu.memory_space<vmem>>, vector<16x128xf32>,
    %c2_i32 = arith.constant 2 : i32
    %26 = arith.cmpi eq, %arg0, %c2_i32 : i32
    %27 = arith.extui %26 : i1 to i32
    %c0_i32_17 = arith.constant 0 : i32
    %28 = arith.cmpi ne, %27, %c0_i32_17 : i32
    scf.if %28 {
      %c0_18 = arith.constant 0 : index
      %c0_19 = arith.constant 0 : index
      %29 = vector.load %arg6[%c0_18, %c0_19] : memref<16x2xbf16, #tpu.memory_space<vmem>>, vector<16x2xbf16>
      %c0_20 = arith.constant 0 : index
      %c0_21 = arith.constant 0 : index
      %30 = vector.load %arg3[%c0_20, %c0_21] : memref<2x128xbf16, #tpu.memory_space<vmem>>, vector<2x128xbf16>
      %cst_22 = arith.constant dense<0.000000e+00> : vector<16x128xf32>
      %31 = tpu.matmul %29, %30, %cst_22 {dimension_numbers = #tpu.dot_dimension_numbers<[1], [0], [0], [1], [0, 0, 1, 1], [], []>} : vector<16x2xbf16>, vector<2x128xbf16>, vector<16x128xf32> -> vector<16x128xf32>
      %c0_23 = arith.constant 0 : index
      %c0_24 = arith.constant 0 : index
      %32 = vector.load %arg1[%c0_23, %c0_24] : memref<16x128xbf16, #tpu.memory_space<vmem>>, vector<16x128xbf16>
      %c0_25 = arith.constant 0 : index
      %c0_26 = arith.constant 0 : index
      %33 = vector.load %arg8[%c0_25, %c0_26] : memref<128x128xbf16, #tpu.memory_space<vmem>>, vector<128x128xbf16>
      %cst_27 = arith.constant dense<0.000000e+00> : vector<16x128xf32>
      %34 = tpu.matmul %32, %33, %cst_27 {dimension_numbers = #tpu.dot_dimension_numbers<[1], [0], [0], [1], [0, 0, 1, 1], [], []>} : vector<16x128xbf16>, vector<128x128xbf16>, vector<16x128xf32> -> vector<16x128xf32>
      %c0_28 = arith.constant 0 : index
      %c0_29 = arith.constant 0 : index
      %35 = vector.load %arg15[%c0_28, %c0_29] : memref<16x128xf32, #tpu.memory_space<vmem>>, vector<16x128xf32>
      %c0_30 = arith.constant 0 : index
      %c0_31 = arith.constant 0 : index
      %36 = vector.load %arg9[%c0_30, %c0_31] : memref<128x128xbf16, #tpu.memory_space<vmem>>, vector<128x128xbf16>
      %cst_32 = arith.constant dense<0.000000e+00> : vector<16x128xf32>
      %37 = tpu.matmul %35, %36, %cst_32 {dimension_numbers = #tpu.dot_dimension_numbers<[1], [0], [0], [1], [0, 0, 1, 1], [], []>} : vector<16x128xf32>, vector<128x128xbf16>, vector<16x128xf32> -> vector<16x128xf32>
      %38 = arith.addf %34, %37 : vector<16x128xf32>
      %c0_33 = arith.constant 0 : index
      %c0_34 = arith.constant 0 : index
      %39 = vector.load %arg10[%c0_33, %c0_34] : memref<128x128xbf16, #tpu.memory_space<vmem>>, vector<128x128xbf16>
      %cst_35 = arith.constant dense<0.000000e+00> : vector<16x128xf32>
      %40 = tpu.matmul %31, %39, %cst_35 {dimension_numbers = #tpu.dot_dimension_numbers<[1], [0], [0], [1], [0, 0, 1, 1], [], []>} : vector<16x128xf32>, vector<128x128xbf16>, vector<16x128xf32> -> vector<16x128xf32>
      %41 = arith.addf %38, %40 : vector<16x128xf32>
      %c0_36 = arith.constant 0 : index
      %c256 = arith.constant 256 : index
      %42 = vector.load %arg12[%c0_36, %c256] : memref<1x512xf32, #tpu.memory_space<vmem>>, vector<1x128xf32>
      %43 = vector.broadcast %42 : vector<1x128xf32> to vector<16x128xf32>
      %44 = arith.addf %41, %43 : vector<16x128xf32>
      %cst_37 = arith.constant 0.000000e+00 : f32
      %45 = vector.broadcast %cst_37 : f32 to vector<16x128xf32>
      %46 = arith.maximumf %44, %45 : vector<16x128xf32>
      %c0_38 = arith.constant 0 : index
      %c0_39 = arith.constant 0 : index
      %47 = vector.load %arg11[%c0_38, %c0_39] : memref<128x128xbf16, #tpu.memory_space<vmem>>, vector<128x128xbf16>
      %cst_40 = arith.constant dense<0.000000e+00> : vector<16x128xf32>
      %48 = tpu.matmul %46, %47, %cst_40 {dimension_numbers = #tpu.dot_dimension_numbers<[1], [0], [0], [1], [0, 0, 1, 1], [], []>} : vector<16x128xf32>, vector<128x128xbf16>, vector<16x128xf32> -> vector<16x128xf32>
      %c0_41 = arith.constant 0 : index
      %c384 = arith.constant 384 : index
      %49 = vector.load %arg12[%c0_41, %c384] : memref<1x512xf32, #tpu.memory_space<vmem>>, vector<1x128xf32>
      %50 = vector.broadcast %49 : vector<1x128xf32> to vector<16x128xf32>
      %51 = arith.addf %48, %50 : vector<16x128xf32>
      %c0_42 = arith.constant 0 : index
      %c0_43 = arith.constant 0 : index
      %52 = vector.load %arg13[%c0_42, %c0_43] : memref<16x128xf32, #tpu.memory_space<vmem>>, vector<16x128xf32>
      tpu.vector_store %arg13[%c0_42, %c0_43], %51 {strides = array<i32>} : memref<16x128xf32, #tpu.memory_space<vmem>>, vector<16x128xf32>,
    } else {
    }
    return
  }
  func.func @transform_0(%arg0: i32) -> (i32, i32) {
    %c0_i32 = arith.constant 0 : i32
    %c0_i32_0 = arith.constant 0 : i32
    %c0_i32_1 = arith.constant 0 : i32
    return %c0_i32, %c0_i32_0 : i32, i32
  }
  func.func @transform_1(%arg0: i32) -> (i32, i32) {
    %c0_i32 = arith.constant 0 : i32
    %c0_i32_0 = arith.constant 0 : i32
    return %arg0, %c0_i32 : i32, i32
  }
  func.func @transform_2(%arg0: i32) -> (i32, i32) {
    %c0_i32 = arith.constant 0 : i32
    %c0_i32_0 = arith.constant 0 : i32
    %c0_i32_1 = arith.constant 0 : i32
    return %c0_i32, %c0_i32_0 : i32, i32
  }
  func.func @transform_3(%arg0: i32) -> (i32, i32) {
    %c0_i32 = arith.constant 0 : i32
    %c0_i32_0 = arith.constant 0 : i32
    return %arg0, %c0_i32 : i32, i32
  }
  func.func @transform_4(%arg0: i32) -> (i32, i32) {
    %c0_i32 = arith.constant 0 : i32
    %c0_i32_0 = arith.constant 0 : i32
    return %arg0, %c0_i32 : i32, i32
  }
  func.func @transform_5(%arg0: i32) -> (i32, i32) {
    %c0_i32 = arith.constant 0 : i32
    %c0_i32_0 = arith.constant 0 : i32
    %c0_i32_1 = arith.constant 0 : i32
    return %c0_i32, %c0_i32_0 : i32, i32
  }
  func.func @transform_6(%arg0: i32) -> (i32, i32) {
    %c0_i32 = arith.constant 0 : i32
    %c0_i32_0 = arith.constant 0 : i32
    %c0_i32_1 = arith.constant 0 : i32
    return %c0_i32, %c0_i32_0 : i32, i32
  }
  func.func @transform_7(%arg0: i32) -> (i32, i32) {
    %c0_i32 = arith.constant 0 : i32
    %c0_i32_0 = arith.constant 0 : i32
    %c0_i32_1 = arith.constant 0 : i32
    return %c0_i32, %c0_i32_0 : i32, i32
  }
  func.func @transform_8(%arg0: i32) -> (i32, i32) {
    %c0_i32 = arith.constant 0 : i32
    %c0_i32_0 = arith.constant 0 : i32
    %c0_i32_1 = arith.constant 0 : i32
    return %c0_i32, %c0_i32_0 : i32, i32
  }
  func.func @transform_9(%arg0: i32) -> (i32, i32) {
    %c0_i32 = arith.constant 0 : i32
    %c0_i32_0 = arith.constant 0 : i32
    %c0_i32_1 = arith.constant 0 : i32
    return %c0_i32, %c0_i32_0 : i32, i32
  }
  func.func @transform_10(%arg0: i32) -> (i32, i32) {
    %c0_i32 = arith.constant 0 : i32
    %c0_i32_0 = arith.constant 0 : i32
    %c0_i32_1 = arith.constant 0 : i32
    return %c0_i32, %c0_i32_0 : i32, i32
  }
  func.func @transform_11(%arg0: i32) -> (i32, i32) {
    %c0_i32 = arith.constant 0 : i32
    %c0_i32_0 = arith.constant 0 : i32
    %c0_i32_1 = arith.constant 0 : i32
    return %c0_i32, %c0_i32_0 : i32, i32
  }
  func.func @transform_12(%arg0: i32) -> (i32, i32) {
    %c0_i32 = arith.constant 0 : i32
    %c0_i32_0 = arith.constant 0 : i32
    %c0_i32_1 = arith.constant 0 : i32
    return %c0_i32, %c0_i32_0 : i32, i32
  }
}

</mosaic_0001>

<llo_original>
// kernel: tpu_custom_call.1
$region0: #{tpu_custom_call.1}
  #allocation0 [shape = 'u32[]', space=smem, size = 0x4, offset = 0x4, fixed_abs, tag = 'smem constant byte address 0x4 - core index']
  #allocation1 [shape = 'u32[144,128]{1,0:T(1,128)}', space=vmem, size = 0x12000, scoped, tag = 'internal scratch']
  #allocation2 [shape = 'f32[16,256]{1,0:T(8,128)}', space=vmem, size = 0x4000, scoped, tag = 'scratch operand']
  #allocation3 [shape = 'f32[16,128]{1,0:T(8,128)}', space=vmem, size = 0x2000, scoped, tag = 'scratch operand']
  %s0 = inlined_call_operand.hbm [shape: bf16[16,128], index: 0, kind: input, shape index: {}]
  %s1 = inlined_call_operand.hbm [shape: bf16[24,128], index: 1, kind: input, shape index: {}]
  %s2 = inlined_call_operand.vmem [shape: bf16[2,128], index: 2, kind: input, shape index: {}]
  %s3 = inlined_call_operand.vmem [shape: bf16[24,16], index: 3, kind: input, shape index: {}]
  %s4 = inlined_call_operand.vmem [shape: bf16[24,16], index: 4, kind: input, shape index: {}]
  %s5 = inlined_call_operand.vmem [shape: bf16[16,2], index: 5, kind: input, shape index: {}]
  %s6 = inlined_call_operand.hbm [shape: bf16[128,256], index: 6, kind: input, shape index: {}]
  %s7 = inlined_call_operand.hbm [shape: bf16[128,128], index: 7, kind: input, shape index: {}]
  %s8 = inlined_call_operand.hbm [shape: bf16[128,128], index: 8, kind: input, shape index: {}]
  %s9 = inlined_call_operand.vmem [shape: bf16[128,128], index: 9, kind: input, shape index: {}]
  %s10 = inlined_call_operand.hbm [shape: bf16[128,128], index: 10, kind: input, shape index: {}]
  %s11 = inlined_call_operand.vmem [shape: f32[1,512], index: 11, kind: input, shape index: {}]
  %s12 = inlined_call_operand.hbm [shape: f32[16,128], index: 12, kind: output, shape index: {}]
  %s13 = sld [smem:[#allocation0]]
  $region113: #{tpu_custom_call.1} parent=0
    _
  %s15 = ssub.s32 1, %s13
  %s16 = scalar_select 0, %s15, %s13
  $region1: #{tpu_custom_call.1} parent=0
    #allocation4 [shape = 'u8[4096]{0}', space=vmem, size = 0x1000, scoped, tag = 'input window, operand 0, single buffered']
    #allocation5 [shape = 's32[2]{0}', space=sflag, size = 0x8, scoped, tag = 'scoped memory for tpu_custom_call.1']
    #allocation6 [shape = 's32[2]{0}', space=sflag, size = 0x8, scoped, tag = 'scoped memory for tpu_custom_call.1']
    #allocation7 [shape = 'u8[4096]{0}', space=vmem, size = 0x1000, scoped, tag = 'input window, operand 1']
    #allocation8 [shape = 's32[2]{0}', space=sflag, size = 0x8, scoped, tag = 'scoped memory for tpu_custom_call.1']
    #allocation9 [shape = 'u8[65536]{0}', space=vmem, size = 0x10000, scoped, tag = 'input window, operand 6, single buffered']
    #allocation10 [shape = 'u8[32768]{0}', space=vmem, size = 0x8000, scoped, tag = 'input window, operand 7, single buffered']
    #allocation11 [shape = 's32[1]{0}', space=sflag, size = 0x4, scoped, tag = 'scoped memory for tpu_custom_call.1']
    #allocation12 [shape = 'u8[32768]{0}', space=vmem, size = 0x8000, scoped, tag = 'input window, operand 8, single buffered']
    #allocation13 [shape = 'u8[32768]{0}', space=vmem, size = 0x8000, scoped, tag = 'input window, operand 10, single buffered']
    #allocation14 [shape = 's32[1]{0}', space=sflag, size = 0x4, scoped, tag = 'scoped memory for tpu_custom_call.1']
    #allocation15 [shape = 'u8[8192]{0}', space=vmem, size = 0x2000, scoped, tag = 'output window, operand 0, single buffered']
    %17 = vsyncpa [#allocation5], 0
    %18 = vsyncpa [#allocation8], 0
    %s19 = scalar_lea.sflag [#allocation8], 1
    %20 = vsyncpa %s19, 0
    %21 = vsyncpa [#allocation11], 0
    %22 = vsyncpa [#allocation14], 0
    %23 = vsyncpa [#allocation6], 0
    loop: start=0, step=1, limit=5
    $region2: #{tpu_custom_call.1} parent=1 // loop_pre_header
      _
    $region3: #{tpu_custom_call.1} parent=1 // loop_header
      %s25 = sphi 0, %s29
      %p26 = scmp.ge.s32.totalorder %s25, 5
      %s33 = sphi 0, %s33
      %s35 = sphi 0, %s33
      %s36 = sphi 0, %s35
      %s50 = sphi 0, %s36
      %s56 = sphi 0, %s58
      %s59 = sphi 0, %s56
      %s60 = sphi 0, %s59
      %s76 = sphi 0, %s60
      %s80 = sphi 0, %s80
      %s82 = sphi 0, %s80
      %s83 = sphi 0, %s82
      %s97 = sphi 0, %s83
      %s103 = sphi 0, %s105
      %s106 = sphi 0, %s103
      %s107 = sphi 0, %s106
      %s123 = sphi 0, %s107
      %s129 = sphi 0, %s131
      %s132 = sphi 0, %s129
      %s133 = sphi 0, %s132
      %s149 = sphi 0, %s133
      %s153 = sphi 0, %s153
      %s155 = sphi 0, %s153
      %s156 = sphi 0, %s155
      %s170 = sphi 0, %s156
      %s174 = sphi 0, %s174
      %s176 = sphi 0, %s174
      %s177 = sphi 0, %s176
      %s191 = sphi 0, %s177
      %s195 = sphi 0, %s195
      %s197 = sphi 0, %s195
      %s198 = sphi 0, %s197
      %s212 = sphi 0, %s198
      %s216 = sphi 0, %s216
      %s218 = sphi 0, %s216
      %s219 = sphi 0, %s218
      %s233 = sphi 0, %s219
      %s237 = sphi 0, %s237
      %s239 = sphi 0, %s237
      %s240 = sphi 0, %s239
      %s254 = sphi 0, %s240
      %s258 = sphi 0, %s258
      %s260 = sphi 0, %s258
      %s261 = sphi 0, %s260
      %s275 = sphi 0, %s261
      %s279 = sphi 0, %s279
      %s281 = sphi 0, %s279
      %s282 = sphi 0, %s281
      %s296 = sphi 0, %s282
      %s300 = sphi 0, %s300
      %s302 = sphi 0, %s300
      %s303 = sphi 0, %s302
      %s317 = sphi 0, %s303
    $region4: #{tpu_custom_call.1} parent=1 // loop_header_branch
      %28 = sbr.rel (%p26) target = $region8
    $region5: #{tpu_custom_call.1} parent=1 // loop_body
      %s30 = ssub.s32 %s25, 1
      %s31 = ssub.s32 %s25, 2
      %s32 = sadd.s32 %s25, 1
      %s34 = sadd.s32 %s33, 1
      %p37 = scmp.eq.s32.totalorder %s25, 2
      %p38 = scmp.ne.s32.totalorder %s33, %s35
      %p39 = scmp.eq.s32.totalorder %s25, 0
      %p40 = por %p38, %p39
      %p41 = scmp.ne.s32.totalorder %s33, %s35
      %p42 = scmp.eq.s32.totalorder %s30, 2
      %p43 = por %p41, %p42
      %p44 = scmp.ne.s32.totalorder %s35, %s36
      %p45 = scmp.eq.s32.totalorder %s30, 0
      %p46 = por %p44, %p45
      %p47 = scmp.ne.s32.totalorder %s35, %s36
      %p48 = scmp.eq.s32.totalorder %s31, 2
      %p49 = por %p47, %p48
      %p51 = scmp.ne.s32.totalorder %s36, %s50
      %p52 = scmp.eq.s32.totalorder %s31, 0
      %p53 = por %p51, %p52
      %s54 = ssub.s32 %s25, %s32
      %p55 = scmp.eq.s32.totalorder %s54, 0
      %s57 = sadd.s32 %s56, 1
      %s58 = scalar_select %p55, %s56, %s57
      %p61 = pneg %p55
      %p62 = scmp.eq.s32.totalorder %s25, 2
      %p63 = por %p61, %p62
      %p64 = scmp.ne.s32.totalorder %s56, %s59
      %p65 = scmp.eq.s32.totalorder %s25, 0
      %p66 = por %p64, %p65
      %p67 = scmp.ne.s32.totalorder %s56, %s59
      %p68 = scmp.eq.s32.totalorder %s30, 2
      %p69 = por %p67, %p68
      %p70 = scmp.ne.s32.totalorder %s59, %s60
      %p71 = scmp.eq.s32.totalorder %s30, 0
      %p72 = por %p70, %p71
      %p73 = scmp.ne.s32.totalorder %s59, %s60
      %p74 = scmp.eq.s32.totalorder %s31, 2
      %p75 = por %p73, %p74
      %p77 = scmp.ne.s32.totalorder %s60, %s76
      %p78 = scmp.eq.s32.totalorder %s31, 0
      %p79 = por %p77, %p78
      %s81 = sadd.s32 %s80, 1
      %p84 = scmp.eq.s32.totalorder %s25, 2
      %p85 = scmp.ne.s32.totalorder %s80, %s82
      %p86 = scmp.eq.s32.totalorder %s25, 0
      %p87 = por %p85, %p86
      %p88 = scmp.ne.s32.totalorder %s80, %s82
      %p89 = scmp.eq.s32.totalorder %s30, 2
      %p90 = por %p88, %p89
      %p91 = scmp.ne.s32.totalorder %s82, %s83
      %p92 = scmp.eq.s32.totalorder %s30, 0
      %p93 = por %p91, %p92
      %p94 = scmp.ne.s32.totalorder %s82, %s83
      %p95 = scmp.eq.s32.totalorder %s31, 2
      %p96 = por %p94, %p95
      %p98 = scmp.ne.s32.totalorder %s83, %s97
      %p99 = scmp.eq.s32.totalorder %s31, 0
      %p100 = por %p98, %p99
      %s101 = ssub.s32 %s25, %s32
      %p102 = scmp.eq.s32.totalorder %s101, 0
      %s104 = sadd.s32 %s103, 1
      %s105 = scalar_select %p102, %s103, %s104
      %p108 = pneg %p102
      %p109 = scmp.eq.s32.totalorder %s25, 2
      %p110 = por %p108, %p109
      %p111 = scmp.ne.s32.totalorder %s103, %s106
      %p112 = scmp.eq.s32.totalorder %s25, 0
      %p113 = por %p111, %p112
      %p114 = scmp.ne.s32.totalorder %s103, %s106
      %p115 = scmp.eq.s32.totalorder %s30, 2
      %p116 = por %p114, %p115
      %p117 = scmp.ne.s32.totalorder %s106, %s107
      %p118 = scmp.eq.s32.totalorder %s30, 0
      %p119 = por %p117, %p118
      %p120 = scmp.ne.s32.totalorder %s106, %s107
      %p121 = scmp.eq.s32.totalorder %s31, 2
      %p122 = por %p120, %p121
      %p124 = scmp.ne.s32.totalorder %s107, %s123
      %p125 = scmp.eq.s32.totalorder %s31, 0
      %p126 = por %p124, %p125
      %s127 = ssub.s32 %s25, %s32
      %p128 = scmp.eq.s32.totalorder %s127, 0
      %s130 = sadd.s32 %s129, 1
      %s131 = scalar_select %p128, %s129, %s130
      %p134 = pneg %p128
      %p135 = scmp.eq.s32.totalorder %s25, 2
      %p136 = por %p134, %p135
      %p137 = scmp.ne.s32.totalorder %s129, %s132
      %p138 = scmp.eq.s32.totalorder %s25, 0
      %p139 = por %p137, %p138
      %p140 = scmp.ne.s32.totalorder %s129, %s132
      %p141 = scmp.eq.s32.totalorder %s30, 2
      %p142 = por %p140, %p141
      %p143 = scmp.ne.s32.totalorder %s132, %s133
      %p144 = scmp.eq.s32.totalorder %s30, 0
      %p145 = por %p143, %p144
      %p146 = scmp.ne.s32.totalorder %s132, %s133
      %p147 = scmp.eq.s32.totalorder %s31, 2
      %p148 = por %p146, %p147
      %p150 = scmp.ne.s32.totalorder %s133, %s149
      %p151 = scmp.eq.s32.totalorder %s31, 0
      %p152 = por %p150, %p151
      %s154 = sadd.s32 %s153, 1
      %p157 = scmp.eq.s32.totalorder %s25, 2
      %p158 = scmp.ne.s32.totalorder %s153, %s155
      %p159 = scmp.eq.s32.totalorder %s25, 0
      %p160 = por %p158, %p159
      %p161 = scmp.ne.s32.totalorder %s153, %s155
      %p162 = scmp.eq.s32.totalorder %s30, 2
      %p163 = por %p161, %p162
      %p164 = scmp.ne.s32.totalorder %s155, %s156
      %p165 = scmp.eq.s32.totalorder %s30, 0
      %p166 = por %p164, %p165
      %p167 = scmp.ne.s32.totalorder %s155, %s156
      %p168 = scmp.eq.s32.totalorder %s31, 2
      %p169 = por %p167, %p168
      %p171 = scmp.ne.s32.totalorder %s156, %s170
      %p172 = scmp.eq.s32.totalorder %s31, 0
      %p173 = por %p171, %p172
      %s175 = sadd.s32 %s174, 1
      %p178 = scmp.eq.s32.totalorder %s25, 2
      %p179 = scmp.ne.s32.totalorder %s174, %s176
      %p180 = scmp.eq.s32.totalorder %s25, 0
      %p181 = por %p179, %p180
      %p182 = scmp.ne.s32.totalorder %s174, %s176
      %p183 = scmp.eq.s32.totalorder %s30, 2
      %p184 = por %p182, %p183
      %p185 = scmp.ne.s32.totalorder %s176, %s177
      %p186 = scmp.eq.s32.totalorder %s30, 0
      %p187 = por %p185, %p186
      %p188 = scmp.ne.s32.totalorder %s176, %s177
      %p189 = scmp.eq.s32.totalorder %s31, 2
      %p190 = por %p188, %p189
      %p192 = scmp.ne.s32.totalorder %s177, %s191
      %p193 = scmp.eq.s32.totalorder %s31, 0
      %p194 = por %p192, %p193
      %s196 = sadd.s32 %s195, 1
      %p199 = scmp.eq.s32.totalorder %s25, 2
      %p200 = scmp.ne.s32.totalorder %s195, %s197
      %p201 = scmp.eq.s32.totalorder %s25, 0
      %p202 = por %p200, %p201
      %p203 = scmp.ne.s32.totalorder %s195, %s197
      %p204 = scmp.eq.s32.totalorder %s30, 2
      %p205 = por %p203, %p204
      %p206 = scmp.ne.s32.totalorder %s197, %s198
      %p207 = scmp.eq.s32.totalorder %s30, 0
      %p208 = por %p206, %p207
      %p209 = scmp.ne.s32.totalorder %s197, %s198
      %p210 = scmp.eq.s32.totalorder %s31, 2
      %p211 = por %p209, %p210
      %p213 = scmp.ne.s32.totalorder %s198, %s212
      %p214 = scmp.eq.s32.totalorder %s31, 0
      %p215 = por %p213, %p214
      %s217 = sadd.s32 %s216, 1
      %p220 = scmp.eq.s32.totalorder %s25, 2
      %p221 = scmp.ne.s32.totalorder %s216, %s218
      %p222 = scmp.eq.s32.totalorder %s25, 0
      %p223 = por %p221, %p222
      %p224 = scmp.ne.s32.totalorder %s216, %s218
      %p225 = scmp.eq.s32.totalorder %s30, 2
      %p226 = por %p224, %p225
      %p227 = scmp.ne.s32.totalorder %s218, %s219
      %p228 = scmp.eq.s32.totalorder %s30, 0
      %p229 = por %p227, %p228
      %p230 = scmp.ne.s32.totalorder %s218, %s219
      %p231 = scmp.eq.s32.totalorder %s31, 2
      %p232 = por %p230, %p231
      %p234 = scmp.ne.s32.totalorder %s219, %s233
      %p235 = scmp.eq.s32.totalorder %s31, 0
      %p236 = por %p234, %p235
      %s238 = sadd.s32 %s237, 1
      %p241 = scmp.eq.s32.totalorder %s25, 2
      %p242 = scmp.ne.s32.totalorder %s237, %s239
      %p243 = scmp.eq.s32.totalorder %s25, 0
      %p244 = por %p242, %p243
      %p245 = scmp.ne.s32.totalorder %s237, %s239
      %p246 = scmp.eq.s32.totalorder %s30, 2
      %p247 = por %p245, %p246
      %p248 = scmp.ne.s32.totalorder %s239, %s240
      %p249 = scmp.eq.s32.totalorder %s30, 0
      %p250 = por %p248, %p249
      %p251 = scmp.ne.s32.totalorder %s239, %s240
      %p252 = scmp.eq.s32.totalorder %s31, 2
      %p253 = por %p251, %p252
      %p255 = scmp.ne.s32.totalorder %s240, %s254
      %p256 = scmp.eq.s32.totalorder %s31, 0
      %p257 = por %p255, %p256
      %s259 = sadd.s32 %s258, 1
      %p262 = scmp.eq.s32.totalorder %s25, 2
      %p263 = scmp.ne.s32.totalorder %s258, %s260
      %p264 = scmp.eq.s32.totalorder %s25, 0
      %p265 = por %p263, %p264
      %p266 = scmp.ne.s32.totalorder %s258, %s260
      %p267 = scmp.eq.s32.totalorder %s30, 2
      %p268 = por %p266, %p267
      %p269 = scmp.ne.s32.totalorder %s260, %s261
      %p270 = scmp.eq.s32.totalorder %s30, 0
      %p271 = por %p269, %p270
      %p272 = scmp.ne.s32.totalorder %s260, %s261
      %p273 = scmp.eq.s32.totalorder %s31, 2
      %p274 = por %p272, %p273
      %p276 = scmp.ne.s32.totalorder %s261, %s275
      %p277 = scmp.eq.s32.totalorder %s31, 0
      %p278 = por %p276, %p277
      %s280 = sadd.s32 %s279, 1
      %p283 = scmp.eq.s32.totalorder %s25, 2
      %p284 = scmp.ne.s32.totalorder %s279, %s281
      %p285 = scmp.eq.s32.totalorder %s25, 0
      %p286 = por %p284, %p285
      %p287 = scmp.ne.s32.totalorder %s279, %s281
      %p288 = scmp.eq.s32.totalorder %s30, 2
      %p289 = por %p287, %p288
      %p290 = scmp.ne.s32.totalorder %s281, %s282
      %p291 = scmp.eq.s32.totalorder %s30, 0
      %p292 = por %p290, %p291
      %p293 = scmp.ne.s32.totalorder %s281, %s282
      %p294 = scmp.eq.s32.totalorder %s31, 2
      %p295 = por %p293, %p294
      %p297 = scmp.ne.s32.totalorder %s282, %s296
      %p298 = scmp.eq.s32.totalorder %s31, 0
      %p299 = por %p297, %p298
      %s301 = sadd.s32 %s300, 1
      %p304 = scmp.eq.s32.totalorder %s25, 2
      %p305 = scmp.ne.s32.totalorder %s300, %s302
      %p306 = scmp.eq.s32.totalorder %s25, 0
      %p307 = por %p305, %p306
      %p308 = scmp.ne.s32.totalorder %s300, %s302
      %p309 = scmp.eq.s32.totalorder %s30, 2
      %p310 = por %p308, %p309
      %p311 = scmp.ne.s32.totalorder %s302, %s303
      %p312 = scmp.eq.s32.totalorder %s30, 0
      %p313 = por %p311, %p312
      %p314 = scmp.ne.s32.totalorder %s302, %s303
      %p315 = scmp.eq.s32.totalorder %s31, 2
      %p316 = por %p314, %p315
      %p318 = scmp.ne.s32.totalorder %s303, %s317
      %p319 = scmp.eq.s32.totalorder %s31, 0
      %p320 = por %p318, %p319
      %p321 = scmp.le.s32.totalorder 1, %s25
      %p322 = scmp.lt.s32.totalorder %s25, 4
      %p323 = pnand %p321, %p322
      %p324 = pneg %p323
      // Predicated region
      $region9: #{tpu_custom_call.1} parent=5 // pred_check
        _
      $region10: #{tpu_custom_call.1} parent=5 // pred_check_branch
        %326 = sbr.rel (%p323) target = $region12
      $region11: #{tpu_custom_call.1} parent=5 // pred_region
        %s327 = ssub.s32 %s25, 1
        // Predicated region
        $region13: #{tpu_custom_call.1} parent=11 // pred_check
          %p328 = pneg %p46
        $region14: #{tpu_custom_call.1} parent=11 // pred_check_branch
          %330 = sbr.rel (%p328) target = $region16
        $region15: #{tpu_custom_call.1} parent=11 // pred_region
          %s332 = ssub.s32 128, 128
          %333 = vsyncadd [#allocation5], %s332
          %s334 = sshll.u32 [#allocation4], 4
          %s335 = int_to_ptr.vmem [resolvable:$true] %s334
          %340 = dma.hbm_to_vmem [thread:$0]  %s0, 128, %s335, [#allocation5], 64, 64, 4
        $region16: #{tpu_custom_call.1} parent=11 // pred_fallthru
          _
        // Predicated region
        $region17: #{tpu_custom_call.1} parent=11 // pred_check
          %p341 = pneg %p93
        $region18: #{tpu_custom_call.1} parent=11 // pred_check_branch
          %343 = sbr.rel (%p341) target = $region20
        $region19: #{tpu_custom_call.1} parent=11 // pred_region
          _
        $region20: #{tpu_custom_call.1} parent=11 // pred_fallthru
          _
        // Predicated region
        $region21: #{tpu_custom_call.1} parent=11 // pred_check
          %p344 = pneg %p166
        $region22: #{tpu_custom_call.1} parent=11 // pred_check_branch
          %346 = sbr.rel (%p344) target = $region24
        $region23: #{tpu_custom_call.1} parent=11 // pred_region
          _
        $region24: #{tpu_custom_call.1} parent=11 // pred_fallthru
          _
        // Predicated region
        $region25: #{tpu_custom_call.1} parent=11 // pred_check
          %p347 = pneg %p187
        $region26: #{tpu_custom_call.1} parent=11 // pred_check_branch
          %349 = sbr.rel (%p347) target = $region28
        $region27: #{tpu_custom_call.1} parent=11 // pred_region
          %s351 = ssub.s32 2048, 2048
          %352 = vsyncadd [#allocation8], %s351
          %s353 = sshll.u32 [#allocation9], 4
          %s354 = int_to_ptr.vmem [resolvable:$true] %s353
          %359 = dma.hbm_to_vmem [thread:$0]  %s6, 2048, %s354, [#allocation8], 128, 128, 8
        $region28: #{tpu_custom_call.1} parent=11 // pred_fallthru
          _
        // Predicated region
        $region29: #{tpu_custom_call.1} parent=11 // pred_check
          %p360 = pneg %p208
        $region30: #{tpu_custom_call.1} parent=11 // pred_check_branch
          %362 = sbr.rel (%p360) target = $region32
        $region31: #{tpu_custom_call.1} parent=11 // pred_region
          %s364 = ssub.s32 1024, 1024
          %365 = vsyncadd [#allocation11], %s364
          %s366 = sshll.u32 [#allocation10], 4
          %s367 = int_to_ptr.vmem [resolvable:$true] %s366
          %372 = dma.hbm_to_vmem [thread:$0]  %s7, 1024, %s367, [#allocation11], 64, 64, 4
        $region32: #{tpu_custom_call.1} parent=11 // pred_fallthru
          _
        // Predicated region
        $region33: #{tpu_custom_call.1} parent=11 // pred_check
          %p373 = pneg %p229
        $region34: #{tpu_custom_call.1} parent=11 // pred_check_branch
          %375 = sbr.rel (%p373) target = $region36
        $region35: #{tpu_custom_call.1} parent=11 // pred_region
          %s377 = ssub.s32 1024, 1024
          %378 = vsyncadd [#allocation11], %s377
          %s379 = sshll.u32 [#allocation12], 4
          %s380 = int_to_ptr.vmem [resolvable:$true] %s379
          %385 = dma.hbm_to_vmem [thread:$0]  %s8, 1024, %s380, [#allocation11], 64, 64, 4
        $region36: #{tpu_custom_call.1} parent=11 // pred_fallthru
          _
        // Predicated region
        $region37: #{tpu_custom_call.1} parent=11 // pred_check
          %p386 = pneg %p250
        $region38: #{tpu_custom_call.1} parent=11 // pred_check_branch
          %388 = sbr.rel (%p386) target = $region40
        $region39: #{tpu_custom_call.1} parent=11 // pred_region
          _
        $region40: #{tpu_custom_call.1} parent=11 // pred_fallthru
          _
        // Predicated region
        $region41: #{tpu_custom_call.1} parent=11 // pred_check
          %p389 = pneg %p271
        $region42: #{tpu_custom_call.1} parent=11 // pred_check_branch
          %391 = sbr.rel (%p389) target = $region44
        $region43: #{tpu_custom_call.1} parent=11 // pred_region
          %s393 = ssub.s32 1024, 1024
          %394 = vsyncadd [#allocation14], %s393
          %s395 = sshll.u32 [#allocation13], 4
          %s396 = int_to_ptr.vmem [resolvable:$true] %s395
          %401 = dma.hbm_to_vmem [thread:$0]  %s10, 1024, %s396, [#allocation14], 64, 64, 4
        $region44: #{tpu_custom_call.1} parent=11 // pred_fallthru
          _
        // Predicated region
        $region45: #{tpu_custom_call.1} parent=11 // pred_check
          %p402 = pneg %p292
        $region46: #{tpu_custom_call.1} parent=11 // pred_check_branch
          %404 = sbr.rel (%p402) target = $region48
        $region47: #{tpu_custom_call.1} parent=11 // pred_region
          _
        $region48: #{tpu_custom_call.1} parent=11 // pred_fallthru
          _
      $region12: #{tpu_custom_call.1} parent=5 // pred_fallthru
        _
      %p405 = scmp.lt.s32.totalorder %s25, 3
      // Predicated region
      $region49: #{tpu_custom_call.1} parent=5 // pred_check
        %p406 = pneg %p405
      $region50: #{tpu_custom_call.1} parent=5 // pred_check_branch
        %408 = sbr.rel (%p406) target = $region52
      $region51: #{tpu_custom_call.1} parent=5 // pred_region
        // Predicated region
        $region53: #{tpu_custom_call.1} parent=51 // pred_check
          %p409 = pneg %p66
        $region54: #{tpu_custom_call.1} parent=51 // pred_check_branch
          %411 = sbr.rel (%p409) target = $region56
        $region55: #{tpu_custom_call.1} parent=51 // pred_region
          %s412 = sand.u32 %s25, 1
          %s413 = scalar_lea.sflag [#allocation8], %s412
          %s414 = sand.u32 %s56, 1
          %s415 = smul.addr %s414, 4
          %s416 = scalar_lea.vmem [#allocation7], %s415
          %s418 = ssub.s32 64, 64
          %419 = vsyncadd %s413, %s418
          %s420 = smul.addr %s25, 64
          %s421 = scalar_lea.hbm %s1, %s420
          %s423 = sshll.u32 %s416, 4
          %s424 = int_to_ptr.vmem [resolvable:$true] %s423
          %426 = dma.hbm_to_vmem [thread:$0]  %s421, 64, %s424, %s413
        $region56: #{tpu_custom_call.1} parent=51 // pred_fallthru
          _
        // Predicated region
        $region57: #{tpu_custom_call.1} parent=51 // pred_check
          %p427 = pneg %p113
        $region58: #{tpu_custom_call.1} parent=51 // pred_check_branch
          %429 = sbr.rel (%p427) target = $region60
        $region59: #{tpu_custom_call.1} parent=51 // pred_region
          %p430 = scmp.lt.s32.totalorder %s25, 2
          %s431 = scalar_select %p430, %s25, 2
          %s432 = smul.addr %s431, 4
          %s433 = scalar_lea.vmem %s3, %s432
        $region60: #{tpu_custom_call.1} parent=51 // pred_fallthru
          _
        // Predicated region
        $region61: #{tpu_custom_call.1} parent=51 // pred_check
          %p434 = pneg %p139
        $region62: #{tpu_custom_call.1} parent=51 // pred_check_branch
          %436 = sbr.rel (%p434) target = $region64
        $region63: #{tpu_custom_call.1} parent=51 // pred_region
          %p437 = scmp.lt.s32.totalorder %s25, 2
          %s438 = scalar_select %p437, %s25, 2
          %s439 = smul.addr %s438, 4
          %s440 = scalar_lea.vmem %s4, %s439
        $region64: #{tpu_custom_call.1} parent=51 // pred_fallthru
          _
      $region52: #{tpu_custom_call.1} parent=5 // pred_fallthru
        _
      %p441 = scmp.le.s32.totalorder 1, %s25
      %p442 = scmp.lt.s32.totalorder %s25, 4
      %p443 = pnand %p441, %p442
      %p444 = pneg %p443
      // Predicated region
      $region65: #{tpu_custom_call.1} parent=5 // pred_check
        _
      $region66: #{tpu_custom_call.1} parent=5 // pred_check_branch
        %446 = sbr.rel (%p443) target = $region68
      $region67: #{tpu_custom_call.1} parent=5 // pred_region
        %s447 = ssub.s32 %s25, 1
        // Predicated region
        $region69: #{tpu_custom_call.1} parent=67 // pred_check
          %p448 = pneg %p46
        $region70: #{tpu_custom_call.1} parent=67 // pred_check_branch
          %450 = sbr.rel (%p448) target = $region72
        $region71: #{tpu_custom_call.1} parent=67 // pred_region
          %451 = dma.done [#allocation5], 128
        $region72: #{tpu_custom_call.1} parent=67 // pred_fallthru
          _
        %s452 = sand.u32 %s30, 1
        %s453 = scalar_lea.sflag [#allocation8], %s452
        %s454 = sand.u32 %s59, 1
        %s455 = smul.addr %s454, 4
        %s456 = scalar_lea.vmem [#allocation7], %s455
        // Predicated region
        $region73: #{tpu_custom_call.1} parent=67 // pred_check
          %p457 = pneg %p72
        $region74: #{tpu_custom_call.1} parent=67 // pred_check_branch
          %459 = sbr.rel (%p457) target = $region76
        $region75: #{tpu_custom_call.1} parent=67 // pred_region
          %460 = dma.done %s453, 64
        $region76: #{tpu_custom_call.1} parent=67 // pred_fallthru
          _
        // Predicated region
        $region77: #{tpu_custom_call.1} parent=67 // pred_check
          %p461 = pneg %p187
        $region78: #{tpu_custom_call.1} parent=67 // pred_check_branch
          %463 = sbr.rel (%p461) target = $region80
        $region79: #{tpu_custom_call.1} parent=67 // pred_region
          %464 = dma.done [#allocation8], 2048
        $region80: #{tpu_custom_call.1} parent=67 // pred_fallthru
          _
        // Predicated region
        $region81: #{tpu_custom_call.1} parent=67 // pred_check
          %p465 = pneg %p208
        $region82: #{tpu_custom_call.1} parent=67 // pred_check_branch
          %467 = sbr.rel (%p465) target = $region84
        $region83: #{tpu_custom_call.1} parent=67 // pred_region
          %468 = dma.done [#allocation11], 1024
        $region84: #{tpu_custom_call.1} parent=67 // pred_fallthru
          _
        // Predicated region
        $region85: #{tpu_custom_call.1} parent=67 // pred_check
          %p469 = pneg %p229
        $region86: #{tpu_custom_call.1} parent=67 // pred_check_branch
          %471 = sbr.rel (%p469) target = $region88
        $region87: #{tpu_custom_call.1} parent=67 // pred_region
          %472 = dma.done [#allocation11], 1024
        $region88: #{tpu_custom_call.1} parent=67 // pred_fallthru
          _
        // Predicated region
        $region89: #{tpu_custom_call.1} parent=67 // pred_check
          %p473 = pneg %p271
        $region90: #{tpu_custom_call.1} parent=67 // pred_check_branch
          %475 = sbr.rel (%p473) target = $region92
        $region91: #{tpu_custom_call.1} parent=67 // pred_region
          %476 = dma.done [#allocation14], 1024
        $region92: #{tpu_custom_call.1} parent=67 // pred_fallthru
          _
        %p477 = pneg %p46
        %p478 = pneg %p43
        %s479 = sand.u32 %s30, 1
        %s480 = scalar_lea.sflag [#allocation8], %s479
        %s481 = sand.u32 %s59, 1
        %s482 = smul.addr %s481, 4
        %s483 = scalar_lea.vmem [#allocation7], %s482
        %p484 = pneg %p72
        %p485 = pneg %p69
        %p486 = pneg %p93
        %p487 = pneg %p90
        %p488 = scmp.lt.s32.totalorder %s30, 2
        %s489 = scalar_select %p488, %s30, 2
        %s490 = smul.addr %s489, 4
        %s491 = scalar_lea.vmem %s3, %s490
        %p492 = pneg %p119
        %p493 = pneg %p116
        %p494 = scmp.lt.s32.totalorder %s30, 2
        %s495 = scalar_select %p494, %s30, 2
        %s496 = smul.addr %s495, 4
        %s497 = scalar_lea.vmem %s4, %s496
        %p498 = pneg %p145
        %p499 = pneg %p142
        %p500 = pneg %p166
        %p501 = pneg %p163
        %p502 = pneg %p187
        %p503 = pneg %p184
        %p504 = pneg %p208
        %p505 = pneg %p205
        %p506 = pneg %p229
        %p507 = pneg %p226
        %p508 = pneg %p250
        %p509 = pneg %p247
        %p510 = pneg %p271
        %p511 = pneg %p268
        %p512 = pneg %p292
        %p513 = pneg %p289
        %p514 = pneg %p313
        %p515 = pneg %p310
        %p516 = scmp.lt.s32.totalorder %s30, 2
        %s517 = scalar_select %p516, %s30, 2
        %s518 = smul.addr %s517, 4
        %s519 = scalar_lea.vmem %s3, %s518
        %p520 = scmp.lt.s32.totalorder %s30, 2
        %s521 = scalar_select %p520, %s30, 2
        %s522 = smul.addr %s521, 4
        %s523 = scalar_lea.vmem %s4, %s522
        %p525 = scmp.eq.s32.totalorder %s30, 0
        // Predicated region
        $region93: #{tpu_custom_call.1} parent=67 // pred_check
          %p526 = pneg %p525
        $region94: #{tpu_custom_call.1} parent=67 // pred_check_branch
          %528 = sbr.rel (%p526) target = $region96
        $region95: #{tpu_custom_call.1} parent=67 // pred_region
          %v529 = vld [vmem:[#allocation4] sm:$0xf]
          %v530 = vld [vmem:[#allocation4 + $0x4] sm:$0xf]
          %v531 = vld [vmem:[#allocation9] sm:$0xff]
          %v532 = vld [vmem:[#allocation9 + $0x8] sm:$0xff]
          %v533 = vld [vmem:[#allocation9 + $0x10] sm:$0xff]
          %v534 = vld [vmem:[#allocation9 + $0x18] sm:$0xff]
          %v535 = vld [vmem:[#allocation9 + $0x20] sm:$0xff]
          %v536 = vld [vmem:[#allocation9 + $0x28] sm:$0xff]
          %v537 = vld [vmem:[#allocation9 + $0x30] sm:$0xff]
          %v538 = vld [vmem:[#allocation9 + $0x38] sm:$0xff]
          %v539 = vld [vmem:[#allocation9 + $0x40] sm:$0xff]
          %v540 = vld [vmem:[#allocation9 + $0x48] sm:$0xff]
          %v541 = vld [vmem:[#allocation9 + $0x50] sm:$0xff]
          %v542 = vld [vmem:[#allocation9 + $0x58] sm:$0xff]
          %v543 = vld [vmem:[#allocation9 + $0x60] sm:$0xff]
          %v544 = vld [vmem:[#allocation9 + $0x68] sm:$0xff]
          %v545 = vld [vmem:[#allocation9 + $0x70] sm:$0xff]
          %v546 = vld [vmem:[#allocation9 + $0x78] sm:$0xff]
          %v547 = vld [vmem:[%s11] sm:$0x3]
          %v549 = vlaneseq
          %v550 = vshrl.u32 %v549, 7
          %v551 = vsub.s32 0, %v550
          %v552 = vrot.slane %v547, %v551
          %v553 = vlaneseq
          %v554 = vshrl.u32 %v553, 7
          %v555 = vsub.s32 1, %v554
          %v556 = vrot.slane %v547, %v555
          %v561 = vunpack.c.l.b16 %v529
          %v562 = vunpack.c.l.b16 %v530
          %v563 = vpack.c.b16 %v562, %v561
          %v581 = vunpack.c.l.b16 %v531
          %v582 = vunpack.c.h.b16 %v531
          %v583 = vunpack.c.l.b16 %v532
          %v584 = vunpack.c.h.b16 %v532
          %v585 = vunpack.c.l.b16 %v533
          %v586 = vunpack.c.h.b16 %v533
          %v587 = vunpack.c.l.b16 %v534
          %v588 = vunpack.c.h.b16 %v534
          %v589 = vunpack.c.l.b16 %v535
          %v590 = vunpack.c.h.b16 %v535
          %v591 = vunpack.c.l.b16 %v536
          %v592 = vunpack.c.h.b16 %v536
          %v593 = vunpack.c.l.b16 %v537
          %v594 = vunpack.c.h.b16 %v537
          %v595 = vunpack.c.l.b16 %v538
          %v596 = vunpack.c.h.b16 %v538
          %v597 = vunpack.c.l.b16 %v539
          %v598 = vunpack.c.h.b16 %v539
          %v599 = vunpack.c.l.b16 %v540
          %v600 = vunpack.c.h.b16 %v540
          %v601 = vunpack.c.l.b16 %v541
          %v602 = vunpack.c.h.b16 %v541
          %v603 = vunpack.c.l.b16 %v542
          %v604 = vunpack.c.h.b16 %v542
          %v605 = vunpack.c.l.b16 %v543
          %v606 = vunpack.c.h.b16 %v543
          %v607 = vunpack.c.l.b16 %v544
          %v608 = vunpack.c.h.b16 %v544
          %v609 = vunpack.c.l.b16 %v545
          %v610 = vunpack.c.h.b16 %v545
          %v611 = vunpack.c.l.b16 %v546
          %v612 = vunpack.c.h.b16 %v546
          %v613 = vpack.c.b16 %v583, %v581
          %v614 = vpack.c.b16 %v584, %v582
          %v615 = vpack.c.b16 %v587, %v585
          %v616 = vpack.c.b16 %v588, %v586
          %v617 = vpack.c.b16 %v591, %v589
          %v618 = vpack.c.b16 %v592, %v590
          %v619 = vpack.c.b16 %v595, %v593
          %v620 = vpack.c.b16 %v596, %v594
          %v621 = vpack.c.b16 %v599, %v597
          %v622 = vpack.c.b16 %v600, %v598
          %v623 = vpack.c.b16 %v603, %v601
          %v624 = vpack.c.b16 %v604, %v602
          %v625 = vpack.c.b16 %v607, %v605
          %v626 = vpack.c.b16 %v608, %v606
          %v627 = vpack.c.b16 %v611, %v609
          %v628 = vpack.c.b16 %v612, %v610
          %645 = vmatprep.subr.bf16.mxu0 %v628
          %646 = vmatpush1.bf16.msra.mxu0 %v627
          %647 = vmatprep.subr.bf16.mxu0 %v626
          %648 = vmatpush1.bf16.msra.mxu0 %v625
          %649 = vmatprep.subr.bf16.mxu0 %v624
          %650 = vmatpush1.bf16.msra.mxu0 %v623
          %651 = vmatprep.subr.bf16.mxu0 %v622
          %652 = vmatpush1.bf16.msra.mxu0 %v621
          %653 = vmatprep.subr.bf16.mxu0 %v620
          %654 = vmatpush1.bf16.msra.mxu0 %v619
          %655 = vmatprep.subr.bf16.mxu0 %v618
          %656 = vmatpush1.bf16.msra.mxu0 %v617
          %657 = vmatprep.subr.bf16.mxu0 %v616
          %658 = vmatpush1.bf16.msra.mxu0 %v615
          %659 = vmatprep.subr.bf16.mxu0 %v614
          %660 = vmatpush1.bf16.msra.mxu0 %v613
          %661 = vmatprep.subr.bf16.mxu0 0
          %662 = vmatpush2.bf16.msra.mxu0 0
          %663 = vmatprep.subr.bf16.mxu0 0
          %664 = vmatpush2.bf16.msra.mxu0 0
          %665 = vmatprep.subr.bf16.mxu0 0
          %666 = vmatpush2.bf16.msra.mxu0 0
          %667 = vmatprep.subr.bf16.mxu0 0
          %668 = vmatpush2.bf16.msra.mxu0 0
          %669 = vmatprep.subr.bf16.mxu0 0
          %670 = vmatpush2.bf16.msra.mxu0 0
          %671 = vmatprep.subr.bf16.mxu0 0
          %672 = vmatpush2.bf16.msra.mxu0 0
          %673 = vmatprep.subr.bf16.mxu0 0
          %674 = vmatpush2.bf16.msra.mxu0 0
          %675 = vmatprep.subr.bf16.mxu0 0
          %676 = vmatpush2.bf16.msra.mxu0 0
          %677 = vmatprep.mubr.bf16.mxu0 0
          %678 = vmatmul.mubr.bf16.gmra.mxu0 %v563
          %v679 = vpop.f32.mrf.mxu0
          %v680 = vadd.f32 %v552, %v679
          %v681 = vpop.f32.mrf.mxu0
          %v682 = vadd.f32 %v556, %v681
          %v683 = vpop.f32.mrf.mxu0
          %v684 = vadd.f32 %v552, %v683
          %v685 = vpop.f32.mrf.mxu0
          %v686 = vadd.f32 %v556, %v685
          %687 = vdwg.mxu0
          %688 = vst [vmem:[#allocation2] sm:$0xff] %v680
          %689 = vst [vmem:[#allocation2 + $0x8] sm:$0xff] %v682
          %690 = vst [vmem:[#allocation2 + $0x10] sm:$0xff] %v684
          %691 = vst [vmem:[#allocation2 + $0x18] sm:$0xff] %v686
          %692 = vst [vmem:[#allocation3] sm:$0xff] 0.0
          %693 = vst [vmem:[#allocation3 + $0x8] sm:$0xff] 0.0
        $region96: #{tpu_custom_call.1} parent=67 // pred_fallthru
          _
        %v694 = vld [vmem:[%s519] sm:$0xf]
        %v695 = vld [vmem:[%s523] sm:$0xf]
        %v696 = vld [vmem:[#allocation2] sm:$0xff]
        %v697 = vld [vmem:[#allocation2 + $0x10] sm:$0xff]
        %vm698 = vcmask 130048
        %v700 = vsel %vm698, %v694, 0
        %702 = vmatprep.subr.mxu0 0.0
        %703 = vmatpush1.msra.mxu0 0.0
        %704 = vmatprep.subr.mxu0 0.0
        %705 = vmatpush1.msra.mxu0 0.0
        %706 = vmatprep.subr.mxu0 0.0
        %707 = vmatpush1.msra.mxu0 0.0
        %708 = vmatprep.subr.mxu0 0.0
        %709 = vmatpush1.msra.mxu0 0.0
        %710 = vmatprep.subr.mxu0 0.0
        %711 = vmatpush1.msra.mxu0 0.0
        %712 = vmatprep.subr.mxu0 0.0
        %713 = vmatpush1.msra.mxu0 0.0
        %714 = vmatprep.subr.mxu0 0.0
        %715 = vmatpush1.msra.mxu0 0.0
        %716 = vmatprep.subr.mxu0 0.0
        %717 = vmatpush1.msra.mxu0 0.0
        %718 = vmatprep.subr.mxu0 0.0
        %719 = vmatpush1.msra.mxu0 0.0
        %720 = vmatprep.subr.mxu0 0.0
        %721 = vmatpush1.msra.mxu0 0.0
        %722 = vmatprep.subr.mxu0 0.0
        %723 = vmatpush1.msra.mxu0 0.0
        %724 = vmatprep.subr.mxu0 0.0
        %725 = vmatpush1.msra.mxu0 0.0
        %726 = vmatprep.subr.mxu0 0.0
        %727 = vmatpush1.msra.mxu0 0.0
        %728 = vmatprep.subr.mxu0 0.0
        %729 = vmatpush1.msra.mxu0 0.0
        %730 = vmatprep.subr.mxu0 0.0
        %731 = vmatpush1.msra.mxu0 %v697
        %732 = vmatprep.subr.mxu0 0.0
        %733 = vmatpush1.msra.mxu0 %v696
        %734 = vmatprep.subr.mxu0 0.0
        %735 = vmatpush2.msra.mxu0 0.0
        %736 = vmatprep.subr.mxu0 0.0
        %737 = vmatpush2.msra.mxu0 0.0
        %738 = vmatprep.subr.mxu0 0.0
        %739 = vmatpush2.msra.mxu0 0.0
        %740 = vmatprep.subr.mxu0 0.0
        %741 = vmatpush2.msra.mxu0 0.0
        %742 = vmatprep.subr.mxu0 0.0
        %743 = vmatpush2.msra.mxu0 0.0
        %744 = vmatprep.subr.mxu0 0.0
        %745 = vmatpush2.msra.mxu0 0.0
        %746 = vmatprep.subr.mxu0 0.0
        %747 = vmatpush2.msra.mxu0 0.0
        %748 = vmatprep.subr.mxu0 0.0
        %749 = vmatpush2.msra.mxu0 0.0
        %750 = vmatprep.subr.mxu0 0.0
        %751 = vmatpush2.msra.mxu0 0.0
        %752 = vmatprep.subr.mxu0 0.0
        %753 = vmatpush2.msra.mxu0 0.0
        %754 = vmatprep.subr.mxu0 0.0
        %755 = vmatpush2.msra.mxu0 0.0
        %756 = vmatprep.subr.mxu0 0.0
        %757 = vmatpush2.msra.mxu0 0.0
        %758 = vmatprep.subr.mxu0 0.0
        %759 = vmatpush2.msra.mxu0 0.0
        %760 = vmatprep.subr.mxu0 0.0
        %761 = vmatpush2.msra.mxu0 0.0
        %762 = vmatprep.subr.mxu0 0.0
        %763 = vmatpush2.msra.mxu0 0.0
        %764 = vmatprep.subr.mxu0 0.0
        %765 = vmatpush2.msra.mxu0 0.0
        %766 = vmatprep.mubr.bf16.mxu0 0
        %767 = vmatmul.mubr.bf16.gmra.mxu0 %v700
        %v768 = vpop.f32.mrf.mxu0
        %v769 = vadd.f32 0.0, %v768
        %v770 = vpop.f32.mrf.mxu0
        %v771 = vpop.f32.mrf.mxu0
        %v772 = vpop.f32.mrf.mxu0
        %773 = vdwg.mxu0
        %v774 = vld [vmem:[#allocation2 + $0x8] sm:$0xff]
        %v775 = vld [vmem:[#allocation2 + $0x18] sm:$0xff]
        %v777 = vsel %vm698, %v695, 0
        %779 = vmatprep.subr.mxu0 0.0
        %780 = vmatpush1.msra.mxu0 0.0
        %781 = vmatprep.subr.mxu0 0.0
        %782 = vmatpush1.msra.mxu0 0.0
        %783 = vmatprep.subr.mxu0 0.0
        %784 = vmatpush1.msra.mxu0 0.0
        %785 = vmatprep.subr.mxu0 0.0
        %786 = vmatpush1.msra.mxu0 0.0
        %787 = vmatprep.subr.mxu0 0.0
        %788 = vmatpush1.msra.mxu0 0.0
        %789 = vmatprep.subr.mxu0 0.0
        %790 = vmatpush1.msra.mxu0 0.0
        %791 = vmatprep.subr.mxu0 0.0
        %792 = vmatpush1.msra.mxu0 0.0
        %793 = vmatprep.subr.mxu0 0.0
        %794 = vmatpush1.msra.mxu0 0.0
        %795 = vmatprep.subr.mxu0 0.0
        %796 = vmatpush1.msra.mxu0 0.0
        %797 = vmatprep.subr.mxu0 0.0
        %798 = vmatpush1.msra.mxu0 0.0
        %799 = vmatprep.subr.mxu0 0.0
        %800 = vmatpush1.msra.mxu0 0.0
        %801 = vmatprep.subr.mxu0 0.0
        %802 = vmatpush1.msra.mxu0 0.0
        %803 = vmatprep.subr.mxu0 0.0
        %804 = vmatpush1.msra.mxu0 0.0
        %805 = vmatprep.subr.mxu0 0.0
        %806 = vmatpush1.msra.mxu0 0.0
        %807 = vmatprep.subr.mxu0 0.0
        %808 = vmatpush1.msra.mxu0 %v775
        %809 = vmatprep.subr.mxu0 0.0
        %810 = vmatpush1.msra.mxu0 %v774
        %811 = vmatprep.subr.mxu0 0.0
        %812 = vmatpush2.msra.mxu0 0.0
        %813 = vmatprep.subr.mxu0 0.0
        %814 = vmatpush2.msra.mxu0 0.0
        %815 = vmatprep.subr.mxu0 0.0
        %816 = vmatpush2.msra.mxu0 0.0
        %817 = vmatprep.subr.mxu0 0.0
        %818 = vmatpush2.msra.mxu0 0.0
        %819 = vmatprep.subr.mxu0 0.0
        %820 = vmatpush2.msra.mxu0 0.0
        %821 = vmatprep.subr.mxu0 0.0
        %822 = vmatpush2.msra.mxu0 0.0
        %823 = vmatprep.subr.mxu0 0.0
        %824 = vmatpush2.msra.mxu0 0.0
        %825 = vmatprep.subr.mxu0 0.0
        %826 = vmatpush2.msra.mxu0 0.0
        %827 = vmatprep.subr.mxu0 0.0
        %828 = vmatpush2.msra.mxu0 0.0
        %829 = vmatprep.subr.mxu0 0.0
        %830 = vmatpush2.msra.mxu0 0.0
        %831 = vmatprep.subr.mxu0 0.0
        %832 = vmatpush2.msra.mxu0 0.0
        %833 = vmatprep.subr.mxu0 0.0
        %834 = vmatpush2.msra.mxu0 0.0
        %835 = vmatprep.subr.mxu0 0.0
        %836 = vmatpush2.msra.mxu0 0.0
        %837 = vmatprep.subr.mxu0 0.0
        %838 = vmatpush2.msra.mxu0 0.0
        %839 = vmatprep.subr.mxu0 0.0
        %840 = vmatpush2.msra.mxu0 0.0
        %841 = vmatprep.subr.mxu0 0.0
        %842 = vmatpush2.msra.mxu0 0.0
        %843 = vmatprep.mubr.bf16.mxu0 0
        %844 = vmatmul.mubr.bf16.gmra.mxu0 %v777
        %v845 = vpop.f32.mrf.mxu0
        %v846 = vadd.f32 0.0, %v845
        %v847 = vpop.f32.mrf.mxu0
        %v848 = vpop.f32.mrf.mxu0
        %v849 = vpop.f32.mrf.mxu0
        %850 = vdwg.mxu0
        %v851 = vmul.f32 %v769, %v846
        %852 = vadd.xlane.f32.xlu0 %v851
        %v853 = vpop.xlane.xlu0 %852
        %v854 = vxor.u32 %v853, 2147483648
        %v855 = vmul.f32 %v854, 1.442695
        %v856 = vpow.pop %v855
        %v857 = vadd.f32 %v856, 1.0
        %v858 = vrcp.pop %v857
        %v859 = vmul.f32 1.0, %v858
        %v860 = vld [vmem:[%s456] sm:$0xf]
        %v861 = vunpack.c.l.bf16 %v860
        %v862 = vmul.f32 %v859, %v861
        %v863 = vld [vmem:[#allocation3] sm:$0xff]
        %v864 = vld [vmem:[#allocation3 + $0x8] sm:$0xff]
        %v865 = vunpack.c.l.bf16 %v695
        %866 = vxpose.xlu0.b32.start [1/16] %v865, 128
        %867 = vxpose.xlu0.b32.cont [2/16] 0.0, 128
        %868 = vxpose.xlu0.b32.cont [3/16] 0.0, 128
        %869 = vxpose.xlu0.b32.cont [4/16] 0.0, 128
        %870 = vxpose.xlu0.b32.cont [5/16] 0.0, 128
        %871 = vxpose.xlu0.b32.cont [6/16] 0.0, 128
        %872 = vxpose.xlu0.b32.cont [7/16] 0.0, 128
        %873 = vxpose.xlu0.b32.cont [8/16] 0.0, 128
        %874 = vxpose.xlu0.b32.cont [9/16] 0.0, 128
        %875 = vxpose.xlu0.b32.cont [10/16] 0.0, 128
        %876 = vxpose.xlu0.b32.cont [11/16] 0.0, 128
        %877 = vxpose.xlu0.b32.cont [12/16] 0.0, 128
        %878 = vxpose.xlu0.b32.cont [13/16] 0.0, 128
        %879 = vxpose.xlu0.b32.cont [14/16] 0.0, 128
        %880 = vxpose.xlu0.b32.cont [15/16] 0.0, 128
        %881 = vxpose.xlu0.b32.end [16/16] 0.0, 128
        %v882 = vpop.trf.xlu0
        %v883 = vpop.trf.xlu0
        %v884 = vpop.trf.xlu0
        %v885 = vpop.trf.xlu0
        %v886 = vpop.trf.xlu0
        %v887 = vpop.trf.xlu0
        %v888 = vpop.trf.xlu0
        %v889 = vpop.trf.xlu0
        %v890 = vpop.trf.xlu0
        %v891 = vpop.trf.xlu0
        %v892 = vpop.trf.xlu0
        %v893 = vpop.trf.xlu0
        %v894 = vpop.trf.xlu0
        %v895 = vpop.trf.xlu0
        %v896 = vpop.trf.xlu0
        %v897 = vpop.trf.xlu0
        %vm898 = vcmask 64512
        %v900 = vsel %vm898, %v882, 0
        %v903 = vsel %vm898, %v883, 0
        %905 = vmatprep.subr.mxu0 0.0
        %906 = vmatpush1.msra.mxu0 0.0
        %907 = vmatprep.subr.mxu0 0.0
        %908 = vmatpush1.msra.mxu0 0.0
        %909 = vmatprep.subr.mxu0 0.0
        %910 = vmatpush1.msra.mxu0 0.0
        %911 = vmatprep.subr.mxu0 0.0
        %912 = vmatpush1.msra.mxu0 0.0
        %913 = vmatprep.subr.mxu0 0.0
        %914 = vmatpush1.msra.mxu0 0.0
        %915 = vmatprep.subr.mxu0 0.0
        %916 = vmatpush1.msra.mxu0 0.0
        %917 = vmatprep.subr.mxu0 0.0
        %918 = vmatpush1.msra.mxu0 0.0
        %919 = vmatprep.subr.mxu0 0.0
        %920 = vmatpush1.msra.mxu0 0.0
        %921 = vmatprep.subr.mxu0 0.0
        %922 = vmatpush1.msra.mxu0 0.0
        %923 = vmatprep.subr.mxu0 0.0
        %924 = vmatpush1.msra.mxu0 0.0
        %925 = vmatprep.subr.mxu0 0.0
        %926 = vmatpush1.msra.mxu0 0.0
        %927 = vmatprep.subr.mxu0 0.0
        %928 = vmatpush1.msra.mxu0 0.0
        %929 = vmatprep.subr.mxu0 0.0
        %930 = vmatpush1.msra.mxu0 0.0
        %931 = vmatprep.subr.mxu0 0.0
        %932 = vmatpush1.msra.mxu0 0.0
        %933 = vmatprep.subr.mxu0 0.0
        %934 = vmatpush1.msra.mxu0 0.0
        %935 = vmatprep.subr.mxu0 0.0
        %936 = vmatpush1.msra.mxu0 %v862
        %937 = vmatprep.subr.mxu0 0.0
        %938 = vmatpush2.msra.mxu0 0.0
        %939 = vmatprep.subr.mxu0 0.0
        %940 = vmatpush2.msra.mxu0 0.0
        %941 = vmatprep.subr.mxu0 0.0
        %942 = vmatpush2.msra.mxu0 0.0
        %943 = vmatprep.subr.mxu0 0.0
        %944 = vmatpush2.msra.mxu0 0.0
        %945 = vmatprep.subr.mxu0 0.0
        %946 = vmatpush2.msra.mxu0 0.0
        %947 = vmatprep.subr.mxu0 0.0
        %948 = vmatpush2.msra.mxu0 0.0
        %949 = vmatprep.subr.mxu0 0.0
        %950 = vmatpush2.msra.mxu0 0.0
        %951 = vmatprep.subr.mxu0 0.0
        %952 = vmatpush2.msra.mxu0 0.0
        %953 = vmatprep.subr.mxu0 0.0
        %954 = vmatpush2.msra.mxu0 0.0
        %955 = vmatprep.subr.mxu0 0.0
        %956 = vmatpush2.msra.mxu0 0.0
        %957 = vmatprep.subr.mxu0 0.0
        %958 = vmatpush2.msra.mxu0 0.0
        %959 = vmatprep.subr.mxu0 0.0
        %960 = vmatpush2.msra.mxu0 0.0
        %961 = vmatprep.subr.mxu0 0.0
        %962 = vmatpush2.msra.mxu0 0.0
        %963 = vmatprep.subr.mxu0 0.0
        %964 = vmatpush2.msra.mxu0 0.0
        %965 = vmatprep.subr.mxu0 0.0
        %966 = vmatpush2.msra.mxu0 0.0
        %967 = vmatprep.subr.mxu0 0.0
        %968 = vmatpush2.msra.mxu0 0.0
        %969 = vmatprep.mubr.f32.mxu0 0.0
        %970 = vmatmul.mubr.f32.gmra.mxu0 %v900
        %v971 = vpop.f32.mrf.mxu0
        %v972 = vadd.f32 0.0, %v971
        %v973 = vpop.f32.mrf.mxu0
        %974 = vmatprep.mubr.f32.mxu0 0.0
        %975 = vmatmul.mubr.f32.gmra.mxu0 %v903
        %v976 = vpop.f32.mrf.mxu0
        %v977 = vadd.f32 0.0, %v976
        %v978 = vpop.f32.mrf.mxu0
        %979 = vdwg.mxu0
        %v980 = vadd.f32 %v863, %v972
        %v981 = vadd.f32 %v864, %v977
        %982 = vst [vmem:[#allocation3] sm:$0xff] %v980
        %983 = vst [vmem:[#allocation3 + $0x8] sm:$0xff] %v981
        %p984 = scmp.eq.s32.totalorder %s30, 2
        // Predicated region
        $region97: #{tpu_custom_call.1} parent=67 // pred_check
          %p985 = pneg %p984
        $region98: #{tpu_custom_call.1} parent=67 // pred_check_branch
          %987 = sbr.rel (%p985) target = $region100
        $region99: #{tpu_custom_call.1} parent=67 // pred_region
          %v988 = vld [vmem:[%s5] sm:$0xf]
          %v989 = vld [vmem:[%s5 + $0x4] sm:$0xf]
          %v990 = vld [vmem:[%s2] sm:$0x1]
          %v993 = vunpack.c.l.b16 %v988
          %v994 = vunpack.c.l.b16 %v989
          %v995 = vpack.c.b16 %v994, %v993
          %vm996 = vcmask 15360
          %v998 = vsel %vm996, %v995, 0
          %vm1000 = vcmask 1040384
          %v1002 = vsel %vm1000, %v990, 0
          %1004 = vmatprep.subr.bf16.mxu0 0
          %1005 = vmatpush1.bf16.msra.mxu0 0
          %1006 = vmatprep.subr.bf16.mxu0 0
          %1007 = vmatpush1.bf16.msra.mxu0 0
          %1008 = vmatprep.subr.bf16.mxu0 0
          %1009 = vmatpush1.bf16.msra.mxu0 0
          %1010 = vmatprep.subr.bf16.mxu0 0
          %1011 = vmatpush1.bf16.msra.mxu0 0
          %1012 = vmatprep.subr.bf16.mxu0 0
          %1013 = vmatpush1.bf16.msra.mxu0 0
          %1014 = vmatprep.subr.bf16.mxu0 0
          %1015 = vmatpush1.bf16.msra.mxu0 0
          %1016 = vmatprep.subr.bf16.mxu0 0
          %1017 = vmatpush1.bf16.msra.mxu0 0
          %1018 = vmatprep.subr.bf16.mxu0 0
          %1019 = vmatpush1.bf16.msra.mxu0 %v1002
          %1020 = vmatprep.subr.bf16.mxu0 0
          %1021 = vmatpush2.bf16.msra.mxu0 0
          %1022 = vmatprep.subr.bf16.mxu0 0
          %1023 = vmatpush2.bf16.msra.mxu0 0
          %1024 = vmatprep.subr.bf16.mxu0 0
          %1025 = vmatpush2.bf16.msra.mxu0 0
          %1026 = vmatprep.subr.bf16.mxu0 0
          %1027 = vmatpush2.bf16.msra.mxu0 0
          %1028 = vmatprep.subr.bf16.mxu0 0
          %1029 = vmatpush2.bf16.msra.mxu0 0
          %1030 = vmatprep.subr.bf16.mxu0 0
          %1031 = vmatpush2.bf16.msra.mxu0 0
          %1032 = vmatprep.subr.bf16.mxu0 0
          %1033 = vmatpush2.bf16.msra.mxu0 0
          %1034 = vmatprep.subr.bf16.mxu0 0
          %1035 = vmatpush2.bf16.msra.mxu0 0
          %1036 = vmatprep.mubr.bf16.mxu0 0
          %1037 = vmatmul.mubr.bf16.gmra.mxu0 %v998
          %v1038 = vpop.f32.mrf.mxu0
          %v1039 = vadd.f32 0.0, %v1038
          %v1040 = vpop.f32.mrf.mxu0
          %v1041 = vpop.f32.mrf.mxu0
          %v1042 = vadd.f32 0.0, %v1041
          %v1043 = vpop.f32.mrf.mxu0
          %1044 = vdwg.mxu0
          %v1045 = vld [vmem:[#allocation4] sm:$0xf]
          %v1046 = vld [vmem:[#allocation4 + $0x4] sm:$0xf]
          %v1047 = vld [vmem:[#allocation10] sm:$0xf]
          %v1048 = vld [vmem:[#allocation10 + $0x4] sm:$0xf]
          %v1049 = vld [vmem:[#allocation10 + $0x8] sm:$0xf]
          %v1050 = vld [vmem:[#allocation10 + $0xc] sm:$0xf]
          %v1051 = vld [vmem:[#allocation10 + $0x10] sm:$0xf]
          %v1052 = vld [vmem:[#allocation10 + $0x14] sm:$0xf]
          %v1053 = vld [vmem:[#allocation10 + $0x18] sm:$0xf]
          %v1054 = vld [vmem:[#allocation10 + $0x1c] sm:$0xf]
          %v1055 = vld [vmem:[#allocation10 + $0x20] sm:$0xf]
          %v1056 = vld [vmem:[#allocation10 + $0x24] sm:$0xf]
          %v1057 = vld [vmem:[#allocation10 + $0x28] sm:$0xf]
          %v1058 = vld [vmem:[#allocation10 + $0x2c] sm:$0xf]
          %v1059 = vld [vmem:[#allocation10 + $0x30] sm:$0xf]
          %v1060 = vld [vmem:[#allocation10 + $0x34] sm:$0xf]
          %v1061 = vld [vmem:[#allocation10 + $0x38] sm:$0xf]
          %v1062 = vld [vmem:[#allocation10 + $0x3c] sm:$0xf]
          %v1063 = vld [vmem:[#allocation3] sm:$0xff]
          %v1064 = vld [vmem:[#allocation3 + $0x8] sm:$0xff]
          %v1065 = vld [vmem:[#allocation12] sm:$0xf]
          %v1066 = vld [vmem:[#allocation12 + $0x4] sm:$0xf]
          %v1067 = vld [vmem:[#allocation12 + $0x8] sm:$0xf]
          %v1068 = vld [vmem:[#allocation12 + $0xc] sm:$0xf]
          %v1069 = vld [vmem:[#allocation12 + $0x10] sm:$0xf]
          %v1070 = vld [vmem:[#allocation12 + $0x14] sm:$0xf]
          %v1071 = vld [vmem:[#allocation12 + $0x18] sm:$0xf]
          %v1072 = vld [vmem:[#allocation12 + $0x1c] sm:$0xf]
          %v1073 = vld [vmem:[#allocation12 + $0x20] sm:$0xf]
          %v1074 = vld [vmem:[#allocation12 + $0x24] sm:$0xf]
          %v1075 = vld [vmem:[#allocation12 + $0x28] sm:$0xf]
          %v1076 = vld [vmem:[#allocation12 + $0x2c] sm:$0xf]
          %v1077 = vld [vmem:[#allocation12 + $0x30] sm:$0xf]
          %v1078 = vld [vmem:[#allocation12 + $0x34] sm:$0xf]
          %v1079 = vld [vmem:[#allocation12 + $0x38] sm:$0xf]
          %v1080 = vld [vmem:[#allocation12 + $0x3c] sm:$0xf]
          %v1097 = vunpack.c.l.b16 %v1065
          %v1098 = vunpack.c.l.b16 %v1066
          %v1099 = vunpack.c.l.b16 %v1067
          %v1100 = vunpack.c.l.b16 %v1068
          %v1101 = vunpack.c.l.b16 %v1069
          %v1102 = vunpack.c.l.b16 %v1070
          %v1103 = vunpack.c.l.b16 %v1071
          %v1104 = vunpack.c.l.b16 %v1072
          %v1105 = vunpack.c.l.b16 %v1073
          %v1106 = vunpack.c.l.b16 %v1074
          %v1107 = vunpack.c.l.b16 %v1075
          %v1108 = vunpack.c.l.b16 %v1076
          %v1109 = vunpack.c.l.b16 %v1077
          %v1110 = vunpack.c.l.b16 %v1078
          %v1111 = vunpack.c.l.b16 %v1079
          %v1112 = vunpack.c.l.b16 %v1080
          %v1113 = vpack.c.b16 %v1098, %v1097
          %v1114 = vpack.c.b16 %v1100, %v1099
          %v1115 = vpack.c.b16 %v1102, %v1101
          %v1116 = vpack.c.b16 %v1104, %v1103
          %v1117 = vpack.c.b16 %v1106, %v1105
          %v1118 = vpack.c.b16 %v1108, %v1107
          %v1119 = vpack.c.b16 %v1110, %v1109
          %v1120 = vpack.c.b16 %v1112, %v1111
          %1129 = vmatprep.subr.bf16.mxu0 0
          %1130 = vmatpush1.bf16.msra.mxu0 %v1120
          %1131 = vmatprep.subr.bf16.mxu0 0
          %1132 = vmatpush1.bf16.msra.mxu0 %v1119
          %1133 = vmatprep.subr.bf16.mxu0 0
          %1134 = vmatpush1.bf16.msra.mxu0 %v1118
          %1135 = vmatprep.subr.bf16.mxu0 0
          %1136 = vmatpush1.bf16.msra.mxu0 %v1117
          %1137 = vmatprep.subr.bf16.mxu0 0
          %1138 = vmatpush1.bf16.msra.mxu0 %v1116
          %1139 = vmatprep.subr.bf16.mxu0 0
          %1140 = vmatpush1.bf16.msra.mxu0 %v1115
          %1141 = vmatprep.subr.bf16.mxu0 0
          %1142 = vmatpush1.bf16.msra.mxu0 %v1114
          %1143 = vmatprep.subr.bf16.mxu0 0
          %1144 = vmatpush1.bf16.msra.mxu0 %v1113
          %1145 = vmatprep.subr.bf16.mxu0 0
          %1146 = vmatpush2.bf16.msra.mxu0 0
          %1147 = vmatprep.subr.bf16.mxu0 0
          %1148 = vmatpush2.bf16.msra.mxu0 0
          %1149 = vmatprep.subr.bf16.mxu0 0
          %1150 = vmatpush2.bf16.msra.mxu0 0
          %1151 = vmatprep.subr.bf16.mxu0 0
          %1152 = vmatpush2.bf16.msra.mxu0 0
          %1153 = vmatprep.subr.bf16.mxu0 0
          %1154 = vmatpush2.bf16.msra.mxu0 0
          %1155 = vmatprep.subr.bf16.mxu0 0
          %1156 = vmatpush2.bf16.msra.mxu0 0
          %1157 = vmatprep.subr.bf16.mxu0 0
          %1158 = vmatpush2.bf16.msra.mxu0 0
          %1159 = vmatprep.subr.bf16.mxu0 0
          %1160 = vmatpush2.bf16.msra.mxu0 0
          %1161 = vmatprep.mubr.f32.mxu0 0.0
          %1162 = vmatmul.mubr.f32.gmra.mxu0 %v1063
          %v1163 = vpop.f32.mrf.mxu0
          %v1164 = vadd.f32 0.0, %v1163
          %v1165 = vpop.f32.mrf.mxu0
          %1166 = vmatprep.mubr.f32.mxu0 0.0
          %1167 = vmatmul.mubr.f32.gmra.mxu0 %v1064
          %v1168 = vpop.f32.mrf.mxu0
          %v1169 = vadd.f32 0.0, %v1168
          %v1170 = vpop.f32.mrf.mxu0
          %1171 = vdwg.mxu0
          %v1174 = vunpack.c.l.b16 %v1045
          %v1175 = vunpack.c.l.b16 %v1046
          %v1176 = vpack.c.b16 %v1175, %v1174
          %v1194 = vunpack.c.l.b16 %v1047
          %v1195 = vunpack.c.l.b16 %v1048
          %v1196 = vunpack.c.l.b16 %v1049
          %v1197 = vunpack.c.l.b16 %v1050
          %v1198 = vunpack.c.l.b16 %v1051
          %v1199 = vunpack.c.l.b16 %v1052
          %v1200 = vunpack.c.l.b16 %v1053
          %v1201 = vunpack.c.l.b16 %v1054
          %v1202 = vunpack.c.l.b16 %v1055
          %v1203 = vunpack.c.l.b16 %v1056
          %v1204 = vunpack.c.l.b16 %v1057
          %v1205 = vunpack.c.l.b16 %v1058
          %v1206 = vunpack.c.l.b16 %v1059
          %v1207 = vunpack.c.l.b16 %v1060
          %v1208 = vunpack.c.l.b16 %v1061
          %v1209 = vunpack.c.l.b16 %v1062
          %v1210 = vpack.c.b16 %v1195, %v1194
          %v1211 = vpack.c.b16 %v1197, %v1196
          %v1212 = vpack.c.b16 %v1199, %v1198
          %v1213 = vpack.c.b16 %v1201, %v1200
          %v1214 = vpack.c.b16 %v1203, %v1202
          %v1215 = vpack.c.b16 %v1205, %v1204
          %v1216 = vpack.c.b16 %v1207, %v1206
          %v1217 = vpack.c.b16 %v1209, %v1208
          %1226 = vmatprep.subr.bf16.mxu0 0
          %1227 = vmatpush1.bf16.msra.mxu0 %v1217
          %1228 = vmatprep.subr.bf16.mxu0 0
          %1229 = vmatpush1.bf16.msra.mxu0 %v1216
          %1230 = vmatprep.subr.bf16.mxu0 0
          %1231 = vmatpush1.bf16.msra.mxu0 %v1215
          %1232 = vmatprep.subr.bf16.mxu0 0
          %1233 = vmatpush1.bf16.msra.mxu0 %v1214
          %1234 = vmatprep.subr.bf16.mxu0 0
          %1235 = vmatpush1.bf16.msra.mxu0 %v1213
          %1236 = vmatprep.subr.bf16.mxu0 0
          %1237 = vmatpush1.bf16.msra.mxu0 %v1212
          %1238 = vmatprep.subr.bf16.mxu0 0
          %1239 = vmatpush1.bf16.msra.mxu0 %v1211
          %1240 = vmatprep.subr.bf16.mxu0 0
          %1241 = vmatpush1.bf16.msra.mxu0 %v1210
          %1242 = vmatprep.subr.bf16.mxu0 0
          %1243 = vmatpush2.bf16.msra.mxu0 0
          %1244 = vmatprep.subr.bf16.mxu0 0
          %1245 = vmatpush2.bf16.msra.mxu0 0
          %1246 = vmatprep.subr.bf16.mxu0 0
          %1247 = vmatpush2.bf16.msra.mxu0 0
          %1248 = vmatprep.subr.bf16.mxu0 0
          %1249 = vmatpush2.bf16.msra.mxu0 0
          %1250 = vmatprep.subr.bf16.mxu0 0
          %1251 = vmatpush2.bf16.msra.mxu0 0
          %1252 = vmatprep.subr.bf16.mxu0 0
          %1253 = vmatpush2.bf16.msra.mxu0 0
          %1254 = vmatprep.subr.bf16.mxu0 0
          %1255 = vmatpush2.bf16.msra.mxu0 0
          %1256 = vmatprep.subr.bf16.mxu0 0
          %1257 = vmatpush2.bf16.msra.mxu0 0
          %1258 = vmatprep.mubr.bf16.mxu0 0
          %1259 = vmatmul.mubr.bf16.gmra.mxu0 %v1176
          %v1260 = vpop.f32.mrf.mxu0
          %v1261 = vadd.f32 %v1164, %v1260
          %v1262 = vpop.f32.mrf.mxu0
          %v1263 = vpop.f32.mrf.mxu0
          %v1264 = vadd.f32 %v1169, %v1263
          %v1265 = vpop.f32.mrf.mxu0
          %1266 = vdwg.mxu0
          %v1267 = vld [vmem:[%s9] sm:$0xf]
          %v1268 = vld [vmem:[%s9 + $0x4] sm:$0xf]
          %v1269 = vld [vmem:[%s9 + $0x8] sm:$0xf]
          %v1270 = vld [vmem:[%s9 + $0xc] sm:$0xf]
          %v1271 = vld [vmem:[%s9 + $0x10] sm:$0xf]
          %v1272 = vld [vmem:[%s9 + $0x14] sm:$0xf]
          %v1273 = vld [vmem:[%s9 + $0x18] sm:$0xf]
          %v1274 = vld [vmem:[%s9 + $0x1c] sm:$0xf]
          %v1275 = vld [vmem:[%s9 + $0x20] sm:$0xf]
          %v1276 = vld [vmem:[%s9 + $0x24] sm:$0xf]
          %v1277 = vld [vmem:[%s9 + $0x28] sm:$0xf]
          %v1278 = vld [vmem:[%s9 + $0x2c] sm:$0xf]
          %v1279 = vld [vmem:[%s9 + $0x30] sm:$0xf]
          %v1280 = vld [vmem:[%s9 + $0x34] sm:$0xf]
          %v1281 = vld [vmem:[%s9 + $0x38] sm:$0xf]
          %v1282 = vld [vmem:[%s9 + $0x3c] sm:$0xf]
          %v1299 = vunpack.c.l.b16 %v1267
          %v1300 = vunpack.c.l.b16 %v1268
          %v1301 = vunpack.c.l.b16 %v1269
          %v1302 = vunpack.c.l.b16 %v1270
          %v1303 = vunpack.c.l.b16 %v1271
          %v1304 = vunpack.c.l.b16 %v1272
          %v1305 = vunpack.c.l.b16 %v1273
          %v1306 = vunpack.c.l.b16 %v1274
          %v1307 = vunpack.c.l.b16 %v1275
          %v1308 = vunpack.c.l.b16 %v1276
          %v1309 = vunpack.c.l.b16 %v1277
          %v1310 = vunpack.c.l.b16 %v1278
          %v1311 = vunpack.c.l.b16 %v1279
          %v1312 = vunpack.c.l.b16 %v1280
          %v1313 = vunpack.c.l.b16 %v1281
          %v1314 = vunpack.c.l.b16 %v1282
          %v1315 = vpack.c.b16 %v1300, %v1299
          %v1316 = vpack.c.b16 %v1302, %v1301
          %v1317 = vpack.c.b16 %v1304, %v1303
          %v1318 = vpack.c.b16 %v1306, %v1305
          %v1319 = vpack.c.b16 %v1308, %v1307
          %v1320 = vpack.c.b16 %v1310, %v1309
          %v1321 = vpack.c.b16 %v1312, %v1311
          %v1322 = vpack.c.b16 %v1314, %v1313
          %1331 = vmatprep.subr.bf16.mxu0 0
          %1332 = vmatpush1.bf16.msra.mxu0 %v1322
          %1333 = vmatprep.subr.bf16.mxu0 0
          %1334 = vmatpush1.bf16.msra.mxu0 %v1321
          %1335 = vmatprep.subr.bf16.mxu0 0
          %1336 = vmatpush1.bf16.msra.mxu0 %v1320
          %1337 = vmatprep.subr.bf16.mxu0 0
          %1338 = vmatpush1.bf16.msra.mxu0 %v1319
          %1339 = vmatprep.subr.bf16.mxu0 0
          %1340 = vmatpush1.bf16.msra.mxu0 %v1318
          %1341 = vmatprep.subr.bf16.mxu0 0
          %1342 = vmatpush1.bf16.msra.mxu0 %v1317
          %1343 = vmatprep.subr.bf16.mxu0 0
          %1344 = vmatpush1.bf16.msra.mxu0 %v1316
          %1345 = vmatprep.subr.bf16.mxu0 0
          %1346 = vmatpush1.bf16.msra.mxu0 %v1315
          %1347 = vmatprep.subr.bf16.mxu0 0
          %1348 = vmatpush2.bf16.msra.mxu0 0
          %1349 = vmatprep.subr.bf16.mxu0 0
          %1350 = vmatpush2.bf16.msra.mxu0 0
          %1351 = vmatprep.subr.bf16.mxu0 0
          %1352 = vmatpush2.bf16.msra.mxu0 0
          %1353 = vmatprep.subr.bf16.mxu0 0
          %1354 = vmatpush2.bf16.msra.mxu0 0
          %1355 = vmatprep.subr.bf16.mxu0 0
          %1356 = vmatpush2.bf16.msra.mxu0 0
          %1357 = vmatprep.subr.bf16.mxu0 0
          %1358 = vmatpush2.bf16.msra.mxu0 0
          %1359 = vmatprep.subr.bf16.mxu0 0
          %1360 = vmatpush2.bf16.msra.mxu0 0
          %1361 = vmatprep.subr.bf16.mxu0 0
          %1362 = vmatpush2.bf16.msra.mxu0 0
          %1363 = vmatprep.mubr.f32.mxu0 0.0
          %1364 = vmatmul.mubr.f32.gmra.mxu0 %v1039
          %v1365 = vpop.f32.mrf.mxu0
          %v1366 = vadd.f32 0.0, %v1365
          %v1367 = vpop.f32.mrf.mxu0
          %1368 = vmatprep.mubr.f32.mxu0 0.0
          %1369 = vmatmul.mubr.f32.gmra.mxu0 %v1042
          %v1370 = vpop.f32.mrf.mxu0
          %v1371 = vadd.f32 0.0, %v1370
          %v1372 = vpop.f32.mrf.mxu0
          %1373 = vdwg.mxu0
          %v1374 = vadd.f32 %v1261, %v1366
          %v1375 = vadd.f32 %v1264, %v1371
          %v1376 = vld [vmem:[%s11 + $0x2] sm:$0x1]
          %v1378 = vlaneseq
          %v1379 = vshrl.u32 %v1378, 7
          %v1380 = vsub.s32 0, %v1379
          %v1381 = vrot.slane %v1376, %v1380
          %v1383 = vadd.f32 %v1374, %v1381
          %v1384 = vadd.f32 %v1375, %v1381
          %v1385 = vmax.f32 %v1383, 0.0
          %v1386 = vmax.f32 %v1384, 0.0
          %v1387 = vld [vmem:[#allocation13] sm:$0xf]
          %v1388 = vld [vmem:[#allocation13 + $0x4] sm:$0xf]
          %v1389 = vld [vmem:[#allocation13 + $0x8] sm:$0xf]
          %v1390 = vld [vmem:[#allocation13 + $0xc] sm:$0xf]
          %v1391 = vld [vmem:[#allocation13 + $0x10] sm:$0xf]
          %v1392 = vld [vmem:[#allocation13 + $0x14] sm:$0xf]
          %v1393 = vld [vmem:[#allocation13 + $0x18] sm:$0xf]
          %v1394 = vld [vmem:[#allocation13 + $0x1c] sm:$0xf]
          %v1395 = vld [vmem:[#allocation13 + $0x20] sm:$0xf]
          %v1396 = vld [vmem:[#allocation13 + $0x24] sm:$0xf]
          %v1397 = vld [vmem:[#allocation13 + $0x28] sm:$0xf]
          %v1398 = vld [vmem:[#allocation13 + $0x2c] sm:$0xf]
          %v1399 = vld [vmem:[#allocation13 + $0x30] sm:$0xf]
          %v1400 = vld [vmem:[#allocation13 + $0x34] sm:$0xf]
          %v1401 = vld [vmem:[#allocation13 + $0x38] sm:$0xf]
          %v1402 = vld [vmem:[#allocation13 + $0x3c] sm:$0xf]
          %v1403 = vld [vmem:[%s11 + $0x3] sm:$0x1]
          %v1405 = vlaneseq
          %v1406 = vshrl.u32 %v1405, 7
          %v1407 = vsub.s32 0, %v1406
          %v1408 = vrot.slane %v1403, %v1407
          %v1426 = vunpack.c.l.b16 %v1387
          %v1427 = vunpack.c.l.b16 %v1388
          %v1428 = vunpack.c.l.b16 %v1389
          %v1429 = vunpack.c.l.b16 %v1390
          %v1430 = vunpack.c.l.b16 %v1391
          %v1431 = vunpack.c.l.b16 %v1392
          %v1432 = vunpack.c.l.b16 %v1393
          %v1433 = vunpack.c.l.b16 %v1394
          %v1434 = vunpack.c.l.b16 %v1395
          %v1435 = vunpack.c.l.b16 %v1396
          %v1436 = vunpack.c.l.b16 %v1397
          %v1437 = vunpack.c.l.b16 %v1398
          %v1438 = vunpack.c.l.b16 %v1399
          %v1439 = vunpack.c.l.b16 %v1400
          %v1440 = vunpack.c.l.b16 %v1401
          %v1441 = vunpack.c.l.b16 %v1402
          %v1442 = vpack.c.b16 %v1427, %v1426
          %v1443 = vpack.c.b16 %v1429, %v1428
          %v1444 = vpack.c.b16 %v1431, %v1430
          %v1445 = vpack.c.b16 %v1433, %v1432
          %v1446 = vpack.c.b16 %v1435, %v1434
          %v1447 = vpack.c.b16 %v1437, %v1436
          %v1448 = vpack.c.b16 %v1439, %v1438
          %v1449 = vpack.c.b16 %v1441, %v1440
          %1458 = vmatprep.subr.bf16.mxu0 0
          %1459 = vmatpush1.bf16.msra.mxu0 %v1449
          %1460 = vmatprep.subr.bf16.mxu0 0
          %1461 = vmatpush1.bf16.msra.mxu0 %v1448
          %1462 = vmatprep.subr.bf16.mxu0 0
          %1463 = vmatpush1.bf16.msra.mxu0 %v1447
          %1464 = vmatprep.subr.bf16.mxu0 0
          %1465 = vmatpush1.bf16.msra.mxu0 %v1446
          %1466 = vmatprep.subr.bf16.mxu0 0
          %1467 = vmatpush1.bf16.msra.mxu0 %v1445
          %1468 = vmatprep.subr.bf16.mxu0 0
          %1469 = vmatpush1.bf16.msra.mxu0 %v1444
          %1470 = vmatprep.subr.bf16.mxu0 0
          %1471 = vmatpush1.bf16.msra.mxu0 %v1443
          %1472 = vmatprep.subr.bf16.mxu0 0
          %1473 = vmatpush1.bf16.msra.mxu0 %v1442
          %1474 = vmatprep.subr.bf16.mxu0 0
          %1475 = vmatpush2.bf16.msra.mxu0 0
          %1476 = vmatprep.subr.bf16.mxu0 0
          %1477 = vmatpush2.bf16.msra.mxu0 0
          %1478 = vmatprep.subr.bf16.mxu0 0
          %1479 = vmatpush2.bf16.msra.mxu0 0
          %1480 = vmatprep.subr.bf16.mxu0 0
          %1481 = vmatpush2.bf16.msra.mxu0 0
          %1482 = vmatprep.subr.bf16.mxu0 0
          %1483 = vmatpush2.bf16.msra.mxu0 0
          %1484 = vmatprep.subr.bf16.mxu0 0
          %1485 = vmatpush2.bf16.msra.mxu0 0
          %1486 = vmatprep.subr.bf16.mxu0 0
          %1487 = vmatpush2.bf16.msra.mxu0 0
          %1488 = vmatprep.subr.bf16.mxu0 0
          %1489 = vmatpush2.bf16.msra.mxu0 0
          %1490 = vmatprep.mubr.f32.mxu0 0.0
          %1491 = vmatmul.mubr.f32.gmra.mxu0 %v1385
          %v1492 = vpop.f32.mrf.mxu0
          %v1493 = vadd.f32 %v1408, %v1492
          %v1494 = vpop.f32.mrf.mxu0
          %1495 = vmatprep.mubr.f32.mxu0 0.0
          %1496 = vmatmul.mubr.f32.gmra.mxu0 %v1386
          %v1497 = vpop.f32.mrf.mxu0
          %v1498 = vadd.f32 %v1408, %v1497
          %v1499 = vpop.f32.mrf.mxu0
          %1500 = vdwg.mxu0
          %1501 = vst [vmem:[#allocation15] sm:$0xff] %v1493
          %1502 = vst [vmem:[#allocation15 + $0x8] sm:$0xff] %v1498
        $region100: #{tpu_custom_call.1} parent=67 // pred_fallthru
          _
        // Predicated region
        $region101: #{tpu_custom_call.1} parent=67 // pred_check
          %p1503 = pneg %p310
        $region102: #{tpu_custom_call.1} parent=67 // pred_check_branch
          %1505 = sbr.rel (%p1503) target = $region104
        $region103: #{tpu_custom_call.1} parent=67 // pred_region
          %s1507 = ssub.s32 256, 256
          %1508 = vsyncadd [#allocation6], %s1507
          %s1509 = sshll.u32 [#allocation15], 4
          %s1510 = int_to_ptr.vmem [resolvable:$true] %s1509
          %1515 = dma.vmem_to_hbm [thread:$0]  %s1510, 256, %s12, [#allocation6], 128, 128, 8
        $region104: #{tpu_custom_call.1} parent=67 // pred_fallthru
          _
        // Predicated region
        $region105: #{tpu_custom_call.1} parent=67 // pred_check
          %p1516 = pneg %p310
        $region106: #{tpu_custom_call.1} parent=67 // pred_check_branch
          %1518 = sbr.rel (%p1516) target = $region108
        $region107: #{tpu_custom_call.1} parent=67 // pred_region
          %1519 = dma.done [#allocation6], 256
        $region108: #{tpu_custom_call.1} parent=67 // pred_fallthru
          _
      $region68: #{tpu_custom_call.1} parent=5 // pred_fallthru
        _
      %p1520 = scmp.le.s32.totalorder 2, %s25
      // Predicated region
      $region109: #{tpu_custom_call.1} parent=5 // pred_check
        %p1521 = pneg %p1520
      $region110: #{tpu_custom_call.1} parent=5 // pred_check_branch
        %1523 = sbr.rel (%p1521) target = $region112
      $region111: #{tpu_custom_call.1} parent=5 // pred_region
        %s1524 = ssub.s32 %s25, 2
      $region112: #{tpu_custom_call.1} parent=5 // pred_fallthru
        _
    $region6: #{tpu_custom_call.1} parent=1 // loop_footer
      %s29 = sadd.s32 1, %s25
    $region7: #{tpu_custom_call.1} parent=1 // loop_footer_branch
      %24 = sbr.rel target = $region3
    $region8: #{tpu_custom_call.1} parent=1 // loop_exit
      _
    %1525 = vsyncpa [#allocation5], 1
    %s1526 = scalar_lea.sflag [#allocation5], 1
    %1527 = vsyncpa %s1526, 1
    %1528 = vsyncpa [#allocation8], 1
    %s1529 = scalar_lea.sflag [#allocation8], 1
    %1530 = vsyncpa %s1529, 1
    %1531 = vsyncpa [#allocation11], 1
    %1532 = vsyncpa [#allocation14], 1
    %1533 = vsyncpa [#allocation6], 1
    %s1534 = scalar_lea.sflag [#allocation6], 1
    %1535 = vsyncpa %s1534, 1

</llo_original>
